<compile_context>
chip_gen: v5e
topology: v5e:2x2
jax: 0.10.0
libtpu: 0.0.40
codegen_flags: <defaults>
</compile_context>

<pallas_src>
import functools

import numpy as np
import jax
import jax.numpy as jnp
from jax.experimental import pallas as pl
from jax.experimental.pallas import tpu as pltpu


def _pick_tile(total, candidates):
    for c in candidates:
        if total >= c and total % c == 0:
            return c
    return total


# -----------------------------------------------------------------------------
# Kernel 1: fused (pool+1x1-conv) encoder + [pred;proj] head + prototype
#           relations + softmax, all channel-first / lane-dense along HW.
# -----------------------------------------------------------------------------
def _decoder_proto_kernel(feat_ref, w_enc_ref, b_enc_ref, w_heads_ref,
                          b_heads_ref, proto_ref, out_ref, *,
                          num_classes, inv_tem, with_proj):
    k = num_classes
    feat = feat_ref[0]                                       # (48, T) bf16

    # fused avg-pool + 1x1-conv encoder projection (bf16 MXU, f32 accumulate)
    enc = jnp.dot(w_enc_ref[...], feat,
                  preferred_element_type=jnp.float32) + b_enc_ref[...]
    enc = jnp.maximum(enc, 0.0)                              # (Cf, T) f32

    # single fused head matmul: rows [0:K] = pred, rows [K:] = proj
    heads = jnp.dot(w_heads_ref[...], enc.astype(jnp.bfloat16),
                    preferred_element_type=jnp.float32) + b_heads_ref[...]
    pred = heads[:k, :]                                      # (K, T)
    proj = heads[k:, :]                                      # (128, T)

    # F.normalize(proto_outs, dim=channel) -- channel is the sublane axis here
    inv_norm = jax.lax.rsqrt(
        jnp.sum(proj * proj, axis=0, keepdims=True) + 1e-24)  # (1, T)
    proj_n = proj * inv_norm

    # relations = prototype^T @ proj_n ; softmax over classes (axis 0)
    rel = jnp.dot(proto_ref[...], proj_n.astype(jnp.bfloat16),
                  preferred_element_type=jnp.float32) * inv_tem      # (K, T)
    m = jnp.max(rel, axis=0, keepdims=True)
    e = jnp.exp(rel - m)
    rel = e * pl.reciprocal(jnp.sum(e, axis=0, keepdims=True), approx=True)

    out_ref[0, 0:k, :] = pred
    out_ref[0, k:2 * k, :] = rel
    if with_proj:
        out_ref[0, 2 * k:, :] = proj          # only DMA'd back when requested


def _run_decoder_proto(feat_t, w_enc_t, b_enc, w_heads_t, b_heads, proto_t,
                       num_classes, tem, with_proj):
    n, cin_ex, hw = feat_t.shape
    feat_ch = w_enc_t.shape[0]
    c_heads = w_heads_t.shape[0]
    proj_ch = c_heads - num_classes
    c_out = 2 * num_classes + (proj_ch if with_proj else 0)

    t_hw = _pick_tile(hw, (2048, 1024, 512, 256, 128))
    grid = (n, hw // t_hw)

    kern = functools.partial(_decoder_proto_kernel,
                             num_classes=num_classes,
                             inv_tem=1.0 / float(tem),
                             with_proj=with_proj)
    wmap = lambda b, t: (0, 0)

    return pl.pallas_call(
        kern,
        out_shape=jax.ShapeDtypeStruct((n, c_out, hw), jnp.float32),
        grid=grid,
        in_specs=[
            pl.BlockSpec((1, cin_ex, t_hw), lambda b, t: (b, 0, t)),
            pl.BlockSpec((feat_ch, cin_ex), wmap),
            pl.BlockSpec((feat_ch, 1), wmap),
            pl.BlockSpec((c_heads, feat_ch), wmap),
            pl.BlockSpec((c_heads, 1), wmap),
            pl.BlockSpec((num_classes, proj_ch), wmap),
        ],
        out_specs=pl.BlockSpec((1, c_out, t_hw), lambda b, t: (b, 0, t)),
        compiler_params=pltpu.CompilerParams(
            dimension_semantics=("parallel", "parallel")),
    )(feat_t, w_enc_t, b_enc, w_heads_t, b_heads, proto_t)


# -----------------------------------------------------------------------------
# Kernel 2: bilinear upsample (align_corners=True), channel-first, H-tiled,
#           two lane-dense matmuls; emits pred / relations [/ proj] as
#           SEPARATE NCHW outputs (no post-hoc channel slice copies).
# -----------------------------------------------------------------------------
def _bilinear_kernel(x_ref, ah_ref, aw_ref, *out_refs, num_classes):
    x = x_ref[0]                                       # (C, h, w) f32
    ah_t = ah_ref[...]                                 # (h, TH)
    aw_t = aw_ref[...]                                 # (w, W)

    xt = jnp.transpose(x, (0, 2, 1))                   # (C, w, h) small transpose
    t = jnp.einsum('cwh,hH->cwH', xt, ah_t,
                   preferred_element_type=jnp.float32)  # (C, w, TH) lane-dense
    tt = jnp.transpose(t, (0, 2, 1))                   # (C, TH, w)
    o = jnp.einsum('chw,wW->chW', tt, aw_t,
                   preferred_element_type=jnp.float32)  # (C, TH, W) lane-dense

    k = num_classes
    out_refs[0][0] = o[:k]                              # pred
    out_refs[1][0] = o[k:2 * k]                         # relations
    if len(out_refs) == 3:
        out_refs[2][0] = o[2 * k:]                      # proj (only if requested)


def _run_bilinear_nchw(x, ah_t, aw_t, num_classes, with_proj):
    n, c, h, w = x.shape
    ho = ah_t.shape[1]
    wo = aw_t.shape[1]
    th = _pick_tile(ho, (256, 128))
    grid = (n, ho // th)
    k = num_classes
    proj_ch = c - 2 * k

    out_shapes = [jax.ShapeDtypeStruct((n, k, ho, wo), jnp.float32),
                  jax.ShapeDtypeStruct((n, k, ho, wo), jnp.float32)]
    out_specs = [pl.BlockSpec((1, k, th, wo), lambda b, i: (b, 0, i, 0)),
                 pl.BlockSpec((1, k, th, wo), lambda b, i: (b, 0, i, 0))]
    if with_proj:
        out_shapes.append(jax.ShapeDtypeStruct((n, proj_ch, ho, wo),
                                               jnp.float32))
        out_specs.append(pl.BlockSpec((1, proj_ch, th, wo),
                                      lambda b, i: (b, 0, i, 0)))

    return pl.pallas_call(
        functools.partial(_bilinear_kernel, num_classes=k),
        out_shape=tuple(out_shapes),
        grid=grid,
        in_specs=[
            pl.BlockSpec((1, c, h, w), lambda b, i: (b, 0, 0, 0)),
            pl.BlockSpec((h, th), lambda b, i: (0, i)),
            pl.BlockSpec((w, wo), lambda b, i: (0, 0)),
        ],
        out_specs=tuple(out_specs),
        compiler_params=pltpu.CompilerParams(
            dimension_semantics=("parallel", "parallel")),
    )(x, ah_t, aw_t)


def _align_corners_matrix(out_size, in_size):
    """Row-stochastic matrix A such that y = A @ x reproduces
    F.interpolate(..., mode='bilinear', align_corners=True) along one axis."""
    a = np.zeros((out_size, in_size), dtype=np.float32)
    if in_size == 1 or out_size == 1:
        a[:, 0] = 1.0
        return a
    scale = (in_size - 1) / (out_size - 1)
    for i in range(out_size):
        src = i * scale
        i0 = min(int(np.floor(src)), in_size - 1)
        i1 = min(i0 + 1, in_size - 1)
        f = src - i0
        a[i, i0] += 1.0 - f
        a[i, i1] += f
    return a


# -----------------------------------------------------------------------------
# Whole forward (jitted so the wrapper im2col / constants fuse into one program)
# -----------------------------------------------------------------------------
def _forward_impl(x, w_enc_t, b_enc, w_heads_t, b_heads, prototype, *,
                  num_classes, down, return_proj, tem):
    n, cin, h, w = x.shape
    d = down
    hp, wp = h // d, w // d
    hw = hp * wp
    k = num_classes

    # im2col of the dxd pooling window (the pool itself is folded into w_enc_t)
    feat_t = jnp.transpose(x.reshape(n, cin, hp, d, wp, d),
                           (0, 1, 3, 5, 2, 4)).reshape(n, cin * d * d, hw)
    feat_t = feat_t.astype(jnp.bfloat16)

    # prototype = F.normalize(self.prototype, dim=0).detach()
    inv = jax.lax.rsqrt(jnp.sum(prototype * prototype,
                                axis=0, keepdims=True) + 1e-24)
    proto_t = (prototype * inv).T.astype(jnp.bfloat16)             # (K, 128)

    low = _run_decoder_proto(feat_t, w_enc_t, b_enc, w_heads_t, b_heads,
                             proto_t, k, tem, return_proj)         # (N, C_out, HW)
    c_out = low.shape[1]
    low = low.reshape(n, c_out, hp, wp)

    ah_t = jnp.asarray(_align_corners_matrix(h, hp).T)             # (hp, H)
    aw_t = jnp.asarray(_align_corners_matrix(w, wp).T)             # (wp, W)

    # one bilinear pass over the concatenated pred|rel[|proj] channels,
    # emitting separate NCHW outputs
    return _run_bilinear_nchw(low, ah_t, aw_t, k, return_proj)


# -----------------------------------------------------------------------------
# Module wrapper
# -----------------------------------------------------------------------------
class ModelBuilderProtoPallas:
    def __init__(self, num_classes=8, in_ch=3, feat_ch=64, proj_ch=128,
                 down=4, coefficient=0.99, key=None):
        if key is None:
            key = jax.random.PRNGKey(0)
        k_proto, k_enc, k_pred, k_proj = jax.random.split(key, 4)

        self.num_classes = num_classes
        self.proj_ch = proj_ch
        self.down = down

        # buffers (as in __init__): prototype = normalize(randn(128, K), dim=0)
        proto = jax.random.normal(k_proto, (proj_ch, num_classes), jnp.float32)
        pn = jnp.sqrt(jnp.sum(proto * proto, axis=0, keepdims=True))
        self.prototype = proto / jnp.maximum(pn, 1e-12)
        self.coefficient = jnp.full((num_classes,), coefficient, jnp.float32)
        self.last_update = jnp.ones((num_classes,), jnp.int32)

        # synthetic encoder / decoder parameters (deterministic)
        s_enc = 1.0 / np.sqrt(in_ch)
        s_head = 1.0 / np.sqrt(feat_ch)
        w_enc = jax.random.normal(k_enc, (in_ch, feat_ch), jnp.float32) * s_enc
        w_pred = jax.random.normal(k_pred, (feat_ch, num_classes),
                                   jnp.float32) * s_head
        w_proj = jax.random.normal(k_proj, (feat_ch, proj_ch),
                                   jnp.float32) * s_head

        dd = down * down
        # encoder weight, transposed, with the dxd average pool folded in
        # (contraction depth in_ch -> in_ch*d*d)
        self.w_enc_t = (jnp.repeat(w_enc.T, dd, axis=1) / dd).astype(jnp.bfloat16)
        self.b_enc = jnp.zeros((feat_ch, 1), jnp.float32)
        # fused [pred ; proj] head, transposed
        self.w_heads_t = jnp.concatenate([w_pred.T, w_proj.T],
                                         axis=0).astype(jnp.bfloat16)
        self.b_heads = jnp.zeros((num_classes + proj_ch, 1), jnp.float32)

        # f32 copies for the pure-JAX reference
        self._w_enc, self._w_pred, self._w_proj = w_enc, w_pred, w_proj

        self._forward = jax.jit(
            _forward_impl,
            static_argnames=("num_classes", "down", "return_proj", "tem"))

    def __call__(self, x, mask=None, return_proj=False, tem=1.0):
        if mask is not None:
            # TODO(synk): masked path / update_prototype (EMA prototype update)
            # of the reference module is not implemented.
            raise NotImplementedError("mask-conditioned path not implemented")

        outs = self._forward(x, self.w_enc_t, self.b_enc, self.w_heads_t,
                             self.b_heads, self.prototype,
                             num_classes=self.num_classes, down=self.down,
                             return_proj=bool(return_proj), tem=float(tem))
        if return_proj:
            pred_outs, relations, proj_resize = outs
            return pred_outs, relations, proj_resize
        pred_outs, relations = outs
        return pred_outs, relations

    # pure-JAX f32 reference of the same synthetic forward (for validation)
    def reference(self, x, return_proj=False, tem=1.0):
        n, cin, h, w = x.shape
        d = self.down
        hp, wp = h // d, w // d
        pooled = jnp.transpose(x, (0, 2, 3, 1)).reshape(
            n, hp, d, wp, d, cin).mean(axis=(2, 4))
        enc = jnp.maximum(pooled.reshape(n, hp * wp, cin) @ self._w_enc, 0.0)
        pred = enc @ self._w_pred
        proj = enc @ self._w_proj
        proj_n = proj / jnp.maximum(
            jnp.linalg.norm(proj, axis=-1, keepdims=True), 1e-12)
        proto = self.prototype / jnp.maximum(
            jnp.linalg.norm(self.prototype, axis=0, keepdims=True), 1e-12)
        rel = jax.nn.softmax((proj_n @ proto) / tem, axis=-1)
        ah = jnp.asarray(_align_corners_matrix(h, hp))
        aw = jnp.asarray(_align_corners_matrix(w, wp))

        def up(y):
            y = y.reshape(n, hp, wp, -1)
            y = jnp.einsum('Hh,nhwc->nHwc', ah, y)
            y = jnp.einsum('Ww,nHwc->nHWc', aw, y)
            return jnp.transpose(y, (0, 3, 1, 2))

        outs = (up(pred), up(rel))
        if return_proj:
            outs = outs + (up(proj),)
        return outs


if __name__ == "__main__":
    key = jax.random.PRNGKey(0)
    kx, kp = jax.random.split(key)

    # small shapes: batch=2, in_channels=3, spatial=16x16, num_classes=8
    x = jax.random.normal(kx, (2, 3, 16, 16), jnp.float32)

    model = ModelBuilderProtoPallas(num_classes=8, in_ch=3, feat_ch=64,
                                    proj_ch=128, down=4, key=kp)

    pred_outs, relations = model(x, mask=None, return_proj=False, tem=1.0)
    jax.block_until_ready((pred_outs, relations))
    assert pred_outs.shape == (2, 8, 16, 16)
    assert relations.shape == (2, 8, 16, 16)

    # softmax rows convexly combined by bilinear weights -> channels sum to ~1
    s = jnp.sum(relations, axis=1)
    assert jnp.max(jnp.abs(s - 1.0)) < 5e-3, "softmax channel sums off"

    # exercise the return_proj variant (proj is only written back when requested)
    p2, r2, proj_resize = model(x, mask=None, return_proj=True, tem=1.0)
    jax.block_until_ready((p2, r2, proj_resize))
    assert p2.shape == (2, 8, 16, 16)
    assert proj_resize.shape == (2, 128, 16, 16)

    # validate against a pure-JAX f32 reference (bf16 MXU inputs -> loose atol)
    ref_pred, ref_rel, ref_proj = model.reference(x, return_proj=True, tem=1.0)
    assert jnp.max(jnp.abs(pred_outs - ref_pred)) < 5e-2
    assert jnp.max(jnp.abs(relations - ref_rel)) < 5e-2
    assert jnp.max(jnp.abs(proj_resize - ref_proj)) < 5e-2

    print("KERNEL_OK")
</pallas_src>

<mosaic_0001>
module attributes {stable_mosaic.version = 11 : i64} {
  func.func @_decoder_proto_kernel(%arg0: i32, %arg1: i32, %arg2: memref<1x48x16xbf16, #tpu.memory_space<vmem>>, %arg3: memref<64x48xbf16, #tpu.memory_space<vmem>>, %arg4: memref<64x1xf32, #tpu.memory_space<vmem>>, %arg5: memref<136x64xbf16, #tpu.memory_space<vmem>>, %arg6: memref<136x1xf32, #tpu.memory_space<vmem>>, %arg7: memref<8x128xbf16, #tpu.memory_space<vmem>>, %arg8: memref<1x16x16xf32, #tpu.memory_space<vmem>>) attributes {dimension_semantics = [#tpu.dimension_semantics<parallel>, #tpu.dimension_semantics<parallel>], iteration_bounds = array<i64: 2, 1>, scalar_prefetch = 0 : i64, scratch_operands = 0 : i64, tpu.core_type = #tpu.core_type<tc>, window_params = [{transform_indices = @transform_0, window_bounds = array<i64: 1, 48, 16>}, {pipeline_mode = #tpu.pipeline_mode<synchronous>, transform_indices = @transform_1, window_bounds = array<i64: 64, 48>}, {pipeline_mode = #tpu.pipeline_mode<synchronous>, transform_indices = @transform_2, window_bounds = array<i64: 64, 1>}, {pipeline_mode = #tpu.pipeline_mode<synchronous>, transform_indices = @transform_3, window_bounds = array<i64: 136, 64>}, {pipeline_mode = #tpu.pipeline_mode<synchronous>, transform_indices = @transform_4, window_bounds = array<i64: 136, 1>}, {pipeline_mode = #tpu.pipeline_mode<synchronous>, transform_indices = @transform_5, window_bounds = array<i64: 8, 128>}, {transform_indices = @transform_6, window_bounds = array<i64: 1, 16, 16>}]} {
    %c0 = arith.constant 0 : index
    %c0_0 = arith.constant 0 : index
    %c0_1 = arith.constant 0 : index
    %0 = vector.load %arg2[%c0, %c0_0, %c0_1] : memref<1x48x16xbf16, #tpu.memory_space<vmem>>, vector<1x48x16xbf16>
    %1 = vector.shape_cast %0 : vector<1x48x16xbf16> to vector<48x16xbf16>
    %c0_2 = arith.constant 0 : index
    %c0_3 = arith.constant 0 : index
    %2 = vector.load %arg3[%c0_2, %c0_3] : memref<64x48xbf16, #tpu.memory_space<vmem>>, vector<64x48xbf16>
    %cst = arith.constant dense<0.000000e+00> : vector<64x16xf32>
    %3 = tpu.matmul %2, %1, %cst {dimension_numbers = #tpu.dot_dimension_numbers<[1], [0], [0], [1], [0, 0, 1, 1], [], []>} : vector<64x48xbf16>, vector<48x16xbf16>, vector<64x16xf32> -> vector<64x16xf32>
    %c0_4 = arith.constant 0 : index
    %c0_5 = arith.constant 0 : index
    %4 = vector.load %arg4[%c0_4, %c0_5] : memref<64x1xf32, #tpu.memory_space<vmem>>, vector<64x1xf32>
    %5 = vector.broadcast %4 : vector<64x1xf32> to vector<64x16xf32>
    %6 = arith.addf %3, %5 : vector<64x16xf32>
    %cst_6 = arith.constant 0.000000e+00 : f32
    %7 = vector.broadcast %cst_6 : f32 to vector<64x16xf32>
    %8 = arith.maximumf %6, %7 : vector<64x16xf32>
    %c0_7 = arith.constant 0 : index
    %c0_8 = arith.constant 0 : index
    %9 = vector.load %arg5[%c0_7, %c0_8] : memref<136x64xbf16, #tpu.memory_space<vmem>>, vector<136x64xbf16>
    %10 = arith.truncf %8 : vector<64x16xf32> to vector<64x16xbf16>
    %cst_9 = arith.constant dense<0.000000e+00> : vector<136x16xf32>
    %11 = tpu.matmul %9, %10, %cst_9 {dimension_numbers = #tpu.dot_dimension_numbers<[1], [0], [0], [1], [0, 0, 1, 1], [], []>} : vector<136x64xbf16>, vector<64x16xbf16>, vector<136x16xf32> -> vector<136x16xf32>
    %c0_10 = arith.constant 0 : index
    %c0_11 = arith.constant 0 : index
    %12 = vector.load %arg6[%c0_10, %c0_11] : memref<136x1xf32, #tpu.memory_space<vmem>>, vector<136x1xf32>
    %13 = vector.broadcast %12 : vector<136x1xf32> to vector<136x16xf32>
    %14 = arith.addf %11, %13 : vector<136x16xf32>
    %15 = vector.extract_strided_slice %14 {offsets = [0, 0], sizes = [8, 16], strides = [1, 1]} : vector<136x16xf32> to vector<8x16xf32>
    %16 = vector.extract_strided_slice %14 {offsets = [8, 0], sizes = [128, 16], strides = [1, 1]} : vector<136x16xf32> to vector<128x16xf32>
    %17 = arith.mulf %16, %16 : vector<128x16xf32>
    %cst_12 = arith.constant dense<0.000000e+00> : vector<16xf32>
    %18 = vector.multi_reduction <add>, %17, %cst_12 [0] : vector<128x16xf32> to vector<16xf32>
    %19 = vector.shape_cast %18 : vector<16xf32> to vector<1x16xf32>
    %cst_13 = arith.constant 1.000000e-24 : f32
    %20 = vector.broadcast %cst_13 : f32 to vector<1x16xf32>
    %21 = arith.addf %19, %20 : vector<1x16xf32>
    %22 = math.rsqrt %21 : vector<1x16xf32>
    %23 = vector.broadcast %22 : vector<1x16xf32> to vector<128x16xf32>
    %24 = arith.mulf %16, %23 : vector<128x16xf32>
    %c0_14 = arith.constant 0 : index
    %c0_15 = arith.constant 0 : index
    %25 = vector.load %arg7[%c0_14, %c0_15] : memref<8x128xbf16, #tpu.memory_space<vmem>>, vector<8x128xbf16>
    %26 = arith.truncf %24 : vector<128x16xf32> to vector<128x16xbf16>
    %cst_16 = arith.constant dense<0.000000e+00> : vector<8x16xf32>
    %27 = tpu.matmul %25, %26, %cst_16 {dimension_numbers = #tpu.dot_dimension_numbers<[1], [0], [0], [1], [0, 0, 1, 1], [], []>} : vector<8x128xbf16>, vector<128x16xbf16>, vector<8x16xf32> -> vector<8x16xf32>
    %cst_17 = arith.constant 1.000000e+00 : f32
    %28 = vector.broadcast %cst_17 : f32 to vector<8x16xf32>
    %29 = arith.mulf %27, %28 : vector<8x16xf32>
    %cst_18 = arith.constant dense<0xFF800000> : vector<16xf32>
    %30 = vector.multi_reduction <maximumf>, %29, %cst_18 [0] : vector<8x16xf32> to vector<16xf32>
    %31 = vector.shape_cast %30 : vector<16xf32> to vector<1x16xf32>
    %32 = vector.broadcast %31 : vector<1x16xf32> to vector<8x16xf32>
    %33 = arith.subf %29, %32 : vector<8x16xf32>
    %34 = math.exp %33 : vector<8x16xf32>
    %cst_19 = arith.constant dense<0.000000e+00> : vector<16xf32>
    %35 = vector.multi_reduction <add>, %34, %cst_19 [0] : vector<8x16xf32> to vector<16xf32>
    %36 = vector.shape_cast %35 : vector<16xf32> to vector<1x16xf32>
    %37 = tpu.reciprocal %36 {approx = true} : vector<1x16xf32> -> vector<1x16xf32>
    %38 = vector.broadcast %37 : vector<1x16xf32> to vector<8x16xf32>
    %39 = arith.mulf %34, %38 : vector<8x16xf32>
    %c0_20 = arith.constant 0 : index
    %c0_21 = arith.constant 0 : index
    %c0_22 = arith.constant 0 : index
    %40 = vector.load %arg8[%c0_20, %c0_21, %c0_22] : memref<1x16x16xf32, #tpu.memory_space<vmem>>, vector<1x8x16xf32>
    %41 = vector.shape_cast %40 : vector<1x8x16xf32> to vector<8x16xf32>
    %42 = vector.shape_cast %15 : vector<8x16xf32> to vector<1x8x16xf32>
    tpu.vector_store %arg8[%c0_20, %c0_21, %c0_22], %42 {strides = array<i32>} : memref<1x16x16xf32, #tpu.memory_space<vmem>>, vector<1x8x16xf32>,
    %c0_23 = arith.constant 0 : index
    %c8 = arith.constant 8 : index
    %c0_24 = arith.constant 0 : index
    %43 = vector.load %arg8[%c0_23, %c8, %c0_24] : memref<1x16x16xf32, #tpu.memory_space<vmem>>, vector<1x8x16xf32>
    %44 = vector.shape_cast %43 : vector<1x8x16xf32> to vector<8x16xf32>
    %45 = vector.shape_cast %39 : vector<8x16xf32> to vector<1x8x16xf32>
    tpu.vector_store %arg8[%c0_23, %c8, %c0_24], %45 {strides = array<i32>} : memref<1x16x16xf32, #tpu.memory_space<vmem>>, vector<1x8x16xf32>,
    return
  }
  func.func @transform_0(%arg0: i32, %arg1: i32) -> (i32, i32, i32) {
    %c0_i32 = arith.constant 0 : i32
    %c0_i32_0 = arith.constant 0 : i32
    return %arg0, %c0_i32, %arg1 : i32, i32, i32
  }
  func.func @transform_1(%arg0: i32, %arg1: i32) -> (i32, i32) {
    %c0_i32 = arith.constant 0 : i32
    %c0_i32_0 = arith.constant 0 : i32
    %c0_i32_1 = arith.constant 0 : i32
    return %c0_i32, %c0_i32_0 : i32, i32
  }
  func.func @transform_2(%arg0: i32, %arg1: i32) -> (i32, i32) {
    %c0_i32 = arith.constant 0 : i32
    %c0_i32_0 = arith.constant 0 : i32
    %c0_i32_1 = arith.constant 0 : i32
    return %c0_i32, %c0_i32_0 : i32, i32
  }
  func.func @transform_3(%arg0: i32, %arg1: i32) -> (i32, i32) {
    %c0_i32 = arith.constant 0 : i32
    %c0_i32_0 = arith.constant 0 : i32
    %c0_i32_1 = arith.constant 0 : i32
    return %c0_i32, %c0_i32_0 : i32, i32
  }
  func.func @transform_4(%arg0: i32, %arg1: i32) -> (i32, i32) {
    %c0_i32 = arith.constant 0 : i32
    %c0_i32_0 = arith.constant 0 : i32
    %c0_i32_1 = arith.constant 0 : i32
    return %c0_i32, %c0_i32_0 : i32, i32
  }
  func.func @transform_5(%arg0: i32, %arg1: i32) -> (i32, i32) {
    %c0_i32 = arith.constant 0 : i32
    %c0_i32_0 = arith.constant 0 : i32
    %c0_i32_1 = arith.constant 0 : i32
    return %c0_i32, %c0_i32_0 : i32, i32
  }
  func.func @transform_6(%arg0: i32, %arg1: i32) -> (i32, i32, i32) {
    %c0_i32 = arith.constant 0 : i32
    %c0_i32_0 = arith.constant 0 : i32
    return %arg0, %c0_i32, %arg1 : i32, i32, i32
  }
}

module attributes {stable_mosaic.version = 11 : i64} {
  func.func @_bilinear_kernel(%arg0: i32, %arg1: i32, %arg2: memref<1x16x4x4xf32, #tpu.memory_space<vmem>>, %arg3: memref<4x16xf32, #tpu.memory_space<vmem>>, %arg4: memref<4x16xf32, #tpu.memory_space<vmem>>, %arg5: memref<1x8x16x16xf32, #tpu.memory_space<vmem>>, %arg6: memref<1x8x16x16xf32, #tpu.memory_space<vmem>>) attributes {dimension_semantics = [#tpu.dimension_semantics<parallel>, #tpu.dimension_semantics<parallel>], iteration_bounds = array<i64: 2, 1>, scalar_prefetch = 0 : i64, scratch_operands = 0 : i64, tpu.core_type = #tpu.core_type<tc>, window_params = [{transform_indices = @transform_0, window_bounds = array<i64: 1, 16, 4, 4>}, {transform_indices = @transform_1, window_bounds = array<i64: 4, 16>}, {pipeline_mode = #tpu.pipeline_mode<synchronous>, transform_indices = @transform_2, window_bounds = array<i64: 4, 16>}, {transform_indices = @transform_3, window_bounds = array<i64: 1, 8, 16, 16>}, {transform_indices = @transform_4, window_bounds = array<i64: 1, 8, 16, 16>}]} {
    %c0 = arith.constant 0 : index
    %c0_0 = arith.constant 0 : index
    %c0_1 = arith.constant 0 : index
    %c0_2 = arith.constant 0 : index
    %0 = vector.load %arg2[%c0, %c0_0, %c0_1, %c0_2] : memref<1x16x4x4xf32, #tpu.memory_space<vmem>>, vector<1x16x4x4xf32>
    %1 = vector.shape_cast %0 : vector<1x16x4x4xf32> to vector<16x4x4xf32>
    %c0_3 = arith.constant 0 : index
    %c0_4 = arith.constant 0 : index
    %2 = vector.load %arg3[%c0_3, %c0_4] : memref<4x16xf32, #tpu.memory_space<vmem>>, vector<4x16xf32>
    %c0_5 = arith.constant 0 : index
    %c0_6 = arith.constant 0 : index
    %3 = vector.load %arg4[%c0_5, %c0_6] : memref<4x16xf32, #tpu.memory_space<vmem>>, vector<4x16xf32>
    %4 = tpu.transpose %1, [0, 2, 1] : vector<16x4x4xf32> -> vector<16x4x4xf32>
    "tpu.trace_start"() <{level = 10 : i32, message = "cwh,hH->cwH"}> : () -> ()
    %cst = arith.constant dense<0.000000e+00> : vector<16x4x16xf32>
    %5 = tpu.matmul %4, %2, %cst {dimension_numbers = #tpu.dot_dimension_numbers<[2], [0], [0, 1], [1], [0, 0, 0, 1, 1, 1], [], []>} : vector<16x4x4xf32>, vector<4x16xf32>, vector<16x4x16xf32> -> vector<16x4x16xf32>
    "tpu.trace_stop"() : () -> ()
    %6 = tpu.transpose %5, [0, 2, 1] : vector<16x4x16xf32> -> vector<16x16x4xf32>
    "tpu.trace_start"() <{level = 10 : i32, message = "chw,wW->chW"}> : () -> ()
    %cst_7 = arith.constant dense<0.000000e+00> : vector<16x16x16xf32>
    %7 = tpu.matmul %6, %3, %cst_7 {dimension_numbers = #tpu.dot_dimension_numbers<[2], [0], [0, 1], [1], [0, 0, 0, 1, 1, 1], [], []>} : vector<16x16x4xf32>, vector<4x16xf32>, vector<16x16x16xf32> -> vector<16x16x16xf32>
    "tpu.trace_stop"() : () -> ()
    %8 = vector.extract_strided_slice %7 {offsets = [0, 0, 0], sizes = [8, 16, 16], strides = [1, 1, 1]} : vector<16x16x16xf32> to vector<8x16x16xf32>
    %c0_8 = arith.constant 0 : index
    %c0_9 = arith.constant 0 : index
    %c0_10 = arith.constant 0 : index
    %c0_11 = arith.constant 0 : index
    %9 = vector.load %arg5[%c0_8, %c0_9, %c0_10, %c0_11] : memref<1x8x16x16xf32, #tpu.memory_space<vmem>>, vector<1x8x16x16xf32>
    %10 = vector.shape_cast %9 : vector<1x8x16x16xf32> to vector<8x16x16xf32>
    %11 = vector.shape_cast %8 : vector<8x16x16xf32> to vector<1x8x16x16xf32>
    tpu.vector_store %arg5[%c0_8, %c0_9, %c0_10, %c0_11], %11 {strides = array<i32>} : memref<1x8x16x16xf32, #tpu.memory_space<vmem>>, vector<1x8x16x16xf32>,
    %12 = vector.extract_strided_slice %7 {offsets = [8, 0, 0], sizes = [8, 16, 16], strides = [1, 1, 1]} : vector<16x16x16xf32> to vector<8x16x16xf32>
    %c0_12 = arith.constant 0 : index
    %c0_13 = arith.constant 0 : index
    %c0_14 = arith.constant 0 : index
    %c0_15 = arith.constant 0 : index
    %13 = vector.load %arg6[%c0_12, %c0_13, %c0_14, %c0_15] : memref<1x8x16x16xf32, #tpu.memory_space<vmem>>, vector<1x8x16x16xf32>
    %14 = vector.shape_cast %13 : vector<1x8x16x16xf32> to vector<8x16x16xf32>
    %15 = vector.shape_cast %12 : vector<8x16x16xf32> to vector<1x8x16x16xf32>
    tpu.vector_store %arg6[%c0_12, %c0_13, %c0_14, %c0_15], %15 {strides = array<i32>} : memref<1x8x16x16xf32, #tpu.memory_space<vmem>>, vector<1x8x16x16xf32>,
    return
  }
  func.func @transform_0(%arg0: i32, %arg1: i32) -> (i32, i32, i32, i32) {
    %c0_i32 = arith.constant 0 : i32
    %c0_i32_0 = arith.constant 0 : i32
    %c0_i32_1 = arith.constant 0 : i32
    %c0_i32_2 = arith.constant 0 : i32
    return %arg0, %c0_i32, %c0_i32_0, %c0_i32_1 : i32, i32, i32, i32
  }
  func.func @transform_1(%arg0: i32, %arg1: i32) -> (i32, i32) {
    %c0_i32 = arith.constant 0 : i32
    %c0_i32_0 = arith.constant 0 : i32
    return %c0_i32, %arg1 : i32, i32
  }
  func.func @transform_2(%arg0: i32, %arg1: i32) -> (i32, i32) {
    %c0_i32 = arith.constant 0 : i32
    %c0_i32_0 = arith.constant 0 : i32
    %c0_i32_1 = arith.constant 0 : i32
    return %c0_i32, %c0_i32_0 : i32, i32
  }
  func.func @transform_3(%arg0: i32, %arg1: i32) -> (i32, i32, i32, i32) {
    %c0_i32 = arith.constant 0 : i32
    %c0_i32_0 = arith.constant 0 : i32
    %c0_i32_1 = arith.constant 0 : i32
    return %arg0, %c0_i32, %arg1, %c0_i32_0 : i32, i32, i32, i32
  }
  func.func @transform_4(%arg0: i32, %arg1: i32) -> (i32, i32, i32, i32) {
    %c0_i32 = arith.constant 0 : i32
    %c0_i32_0 = arith.constant 0 : i32
    %c0_i32_1 = arith.constant 0 : i32
    return %arg0, %c0_i32, %arg1, %c0_i32_0 : i32, i32, i32, i32
  }
}

</mosaic_0001>

<llo_original>
// kernel: _forward_impl.2
$region0: #{_forward_impl.2}
  #allocation0 [shape = 'u32[]', space=smem, size = 0x4, offset = 0x4, fixed_abs, tag = 'smem constant byte address 0x4 - core index']
  #allocation1 [shape = 'u32[72,128]{1,0:T(1,128)}', space=vmem, size = 0x9000, scoped, tag = 'internal scratch']
  %s0 = inlined_call_operand.vmem [shape: bf16[2,48,16], index: 0, kind: input, shape index: {}]
  %s1 = inlined_call_operand.vmem [shape: bf16[64,48], index: 1, kind: input, shape index: {}]
  %s2 = inlined_call_operand.vmem [shape: f32[64,1], index: 2, kind: input, shape index: {}]
  %s3 = inlined_call_operand.vmem [shape: bf16[136,64], index: 3, kind: input, shape index: {}]
  %s4 = inlined_call_operand.vmem [shape: f32[136,1], index: 4, kind: input, shape index: {}]
  %s5 = inlined_call_operand.vmem [shape: bf16[8,128], index: 5, kind: input, shape index: {}]
  %s6 = inlined_call_operand.vmem [shape: f32[2,16,16], index: 6, kind: output, shape index: {}]
  %s7 = sld [smem:[#allocation0]]
  $region57: #{_forward_impl.2} parent=0
    _
  %s9 = ssub.s32 1, %s7
  %s10 = scalar_select 0, %s9, %s7
  loop: start=0, step=1, limit=4
  $region2: #{_forward_impl.2} parent=0 // loop_pre_header
    _
  $region3: #{_forward_impl.2} parent=0 // loop_header
    %s12 = sphi 0, %s16
    %p13 = scmp.ge.s32.totalorder %s12, 4
    %s19 = sphi 0, %s31
    %s20 = sphi 0, %s27
    %s21 = sphi 0, %s19
    %s22 = sphi 0, %s20
    %s23 = sphi 0, %s21
    %s24 = sphi 0, %s22
    %s36 = sphi 0, %s38
    %s39 = sphi 0, %s36
    %s40 = sphi 0, %s39
    %s56 = sphi 0, %s40
    %s60 = sphi 0, %s60
    %s62 = sphi 0, %s60
    %s63 = sphi 0, %s62
    %s77 = sphi 0, %s63
    %s81 = sphi 0, %s81
    %s83 = sphi 0, %s81
    %s84 = sphi 0, %s83
    %s98 = sphi 0, %s84
    %s102 = sphi 0, %s102
    %s104 = sphi 0, %s102
    %s105 = sphi 0, %s104
    %s119 = sphi 0, %s105
    %s123 = sphi 0, %s123
    %s125 = sphi 0, %s123
    %s126 = sphi 0, %s125
    %s140 = sphi 0, %s126
    %s144 = sphi 0, %s144
    %s146 = sphi 0, %s144
    %s147 = sphi 0, %s146
    %s161 = sphi 0, %s147
    %s169 = sphi 0, %s171
    %s172 = sphi 0, %s169
    %s173 = sphi 0, %s172
    %s189 = sphi 0, %s173
  $region4: #{_forward_impl.2} parent=0 // loop_header_branch
    %15 = sbr.rel (%p13) target = $region8
  $region5: #{_forward_impl.2} parent=0 // loop_body
    %s17 = ssub.s32 %s12, 1
    %s18 = ssub.s32 %s12, 2
    %s25 = sadd.s32 1, %s20
    %p26 = scmp.ge.s32.totalorder %s25, 1
    %s27 = scalar_select %p26, 0, %s25
    %s28 = sadd.s32 1, %s19
    %s29 = scalar_select %p26, %s28, %s19
    %p30 = scmp.ge.s32.totalorder %s29, 2
    %s31 = scalar_select %p30, 0, %s29
    %s32 = ssub.s32 %s19, %s31
    %s33 = ssub.s32 %s20, %s27
    %s34 = sor.u32 %s32, %s33
    %p35 = scmp.eq.s32.totalorder %s34, 0
    %s37 = sadd.s32 %s36, 1
    %s38 = scalar_select %p35, %s36, %s37
    %p41 = pneg %p35
    %p42 = scmp.eq.s32.totalorder %s12, 1
    %p43 = por %p41, %p42
    %p44 = scmp.ne.s32.totalorder %s36, %s39
    %p45 = scmp.eq.s32.totalorder %s12, 0
    %p46 = por %p44, %p45
    %p47 = scmp.ne.s32.totalorder %s36, %s39
    %p48 = scmp.eq.s32.totalorder %s17, 1
    %p49 = por %p47, %p48
    %p50 = scmp.ne.s32.totalorder %s39, %s40
    %p51 = scmp.eq.s32.totalorder %s17, 0
    %p52 = por %p50, %p51
    %p53 = scmp.ne.s32.totalorder %s39, %s40
    %p54 = scmp.eq.s32.totalorder %s18, 1
    %p55 = por %p53, %p54
    %p57 = scmp.ne.s32.totalorder %s40, %s56
    %p58 = scmp.eq.s32.totalorder %s18, 0
    %p59 = por %p57, %p58
    %s61 = sadd.s32 %s60, 1
    %p64 = scmp.eq.s32.totalorder %s12, 1
    %p65 = scmp.ne.s32.totalorder %s60, %s62
    %p66 = scmp.eq.s32.totalorder %s12, 0
    %p67 = por %p65, %p66
    %p68 = scmp.ne.s32.totalorder %s60, %s62
    %p69 = scmp.eq.s32.totalorder %s17, 1
    %p70 = por %p68, %p69
    %p71 = scmp.ne.s32.totalorder %s62, %s63
    %p72 = scmp.eq.s32.totalorder %s17, 0
    %p73 = por %p71, %p72
    %p74 = scmp.ne.s32.totalorder %s62, %s63
    %p75 = scmp.eq.s32.totalorder %s18, 1
    %p76 = por %p74, %p75
    %p78 = scmp.ne.s32.totalorder %s63, %s77
    %p79 = scmp.eq.s32.totalorder %s18, 0
    %p80 = por %p78, %p79
    %s82 = sadd.s32 %s81, 1
    %p85 = scmp.eq.s32.totalorder %s12, 1
    %p86 = scmp.ne.s32.totalorder %s81, %s83
    %p87 = scmp.eq.s32.totalorder %s12, 0
    %p88 = por %p86, %p87
    %p89 = scmp.ne.s32.totalorder %s81, %s83
    %p90 = scmp.eq.s32.totalorder %s17, 1
    %p91 = por %p89, %p90
    %p92 = scmp.ne.s32.totalorder %s83, %s84
    %p93 = scmp.eq.s32.totalorder %s17, 0
    %p94 = por %p92, %p93
    %p95 = scmp.ne.s32.totalorder %s83, %s84
    %p96 = scmp.eq.s32.totalorder %s18, 1
    %p97 = por %p95, %p96
    %p99 = scmp.ne.s32.totalorder %s84, %s98
    %p100 = scmp.eq.s32.totalorder %s18, 0
    %p101 = por %p99, %p100
    %s103 = sadd.s32 %s102, 1
    %p106 = scmp.eq.s32.totalorder %s12, 1
    %p107 = scmp.ne.s32.totalorder %s102, %s104
    %p108 = scmp.eq.s32.totalorder %s12, 0
    %p109 = por %p107, %p108
    %p110 = scmp.ne.s32.totalorder %s102, %s104
    %p111 = scmp.eq.s32.totalorder %s17, 1
    %p112 = por %p110, %p111
    %p113 = scmp.ne.s32.totalorder %s104, %s105
    %p114 = scmp.eq.s32.totalorder %s17, 0
    %p115 = por %p113, %p114
    %p116 = scmp.ne.s32.totalorder %s104, %s105
    %p117 = scmp.eq.s32.totalorder %s18, 1
    %p118 = por %p116, %p117
    %p120 = scmp.ne.s32.totalorder %s105, %s119
    %p121 = scmp.eq.s32.totalorder %s18, 0
    %p122 = por %p120, %p121
    %s124 = sadd.s32 %s123, 1
    %p127 = scmp.eq.s32.totalorder %s12, 1
    %p128 = scmp.ne.s32.totalorder %s123, %s125
    %p129 = scmp.eq.s32.totalorder %s12, 0
    %p130 = por %p128, %p129
    %p131 = scmp.ne.s32.totalorder %s123, %s125
    %p132 = scmp.eq.s32.totalorder %s17, 1
    %p133 = por %p131, %p132
    %p134 = scmp.ne.s32.totalorder %s125, %s126
    %p135 = scmp.eq.s32.totalorder %s17, 0
    %p136 = por %p134, %p135
    %p137 = scmp.ne.s32.totalorder %s125, %s126
    %p138 = scmp.eq.s32.totalorder %s18, 1
    %p139 = por %p137, %p138
    %p141 = scmp.ne.s32.totalorder %s126, %s140
    %p142 = scmp.eq.s32.totalorder %s18, 0
    %p143 = por %p141, %p142
    %s145 = sadd.s32 %s144, 1
    %p148 = scmp.eq.s32.totalorder %s12, 1
    %p149 = scmp.ne.s32.totalorder %s144, %s146
    %p150 = scmp.eq.s32.totalorder %s12, 0
    %p151 = por %p149, %p150
    %p152 = scmp.ne.s32.totalorder %s144, %s146
    %p153 = scmp.eq.s32.totalorder %s17, 1
    %p154 = por %p152, %p153
    %p155 = scmp.ne.s32.totalorder %s146, %s147
    %p156 = scmp.eq.s32.totalorder %s17, 0
    %p157 = por %p155, %p156
    %p158 = scmp.ne.s32.totalorder %s146, %s147
    %p159 = scmp.eq.s32.totalorder %s18, 1
    %p160 = por %p158, %p159
    %p162 = scmp.ne.s32.totalorder %s147, %s161
    %p163 = scmp.eq.s32.totalorder %s18, 0
    %p164 = por %p162, %p163
    %s165 = ssub.s32 %s19, %s31
    %s166 = ssub.s32 %s20, %s27
    %s167 = sor.u32 %s165, %s166
    %p168 = scmp.eq.s32.totalorder %s167, 0
    %s170 = sadd.s32 %s169, 1
    %s171 = scalar_select %p168, %s169, %s170
    %p174 = pneg %p168
    %p175 = scmp.eq.s32.totalorder %s12, 1
    %p176 = por %p174, %p175
    %p177 = scmp.ne.s32.totalorder %s169, %s172
    %p178 = scmp.eq.s32.totalorder %s12, 0
    %p179 = por %p177, %p178
    %p180 = scmp.ne.s32.totalorder %s169, %s172
    %p181 = scmp.eq.s32.totalorder %s17, 1
    %p182 = por %p180, %p181
    %p183 = scmp.ne.s32.totalorder %s172, %s173
    %p184 = scmp.eq.s32.totalorder %s17, 0
    %p185 = por %p183, %p184
    %p186 = scmp.ne.s32.totalorder %s172, %s173
    %p187 = scmp.eq.s32.totalorder %s18, 1
    %p188 = por %p186, %p187
    %p190 = scmp.ne.s32.totalorder %s173, %s189
    %p191 = scmp.eq.s32.totalorder %s18, 0
    %p192 = por %p190, %p191
    %p193 = scmp.le.s32.totalorder 1, %s12
    %p194 = scmp.lt.s32.totalorder %s12, 3
    %p195 = pnand %p193, %p194
    %p196 = pneg %p195
    // Predicated region
    $region9: #{_forward_impl.2} parent=5 // pred_check
      _
    $region10: #{_forward_impl.2} parent=5 // pred_check_branch
      %198 = sbr.rel (%p195) target = $region12
    $region11: #{_forward_impl.2} parent=5 // pred_region
      %s199 = ssub.s32 %s12, 1
      // Predicated region
      $region13: #{_forward_impl.2} parent=11 // pred_check
        %p200 = pneg %p73
      $region14: #{_forward_impl.2} parent=11 // pred_check_branch
        %202 = sbr.rel (%p200) target = $region16
      $region15: #{_forward_impl.2} parent=11 // pred_region
        _
      $region16: #{_forward_impl.2} parent=11 // pred_fallthru
        _
      // Predicated region
      $region17: #{_forward_impl.2} parent=11 // pred_check
        %p203 = pneg %p94
      $region18: #{_forward_impl.2} parent=11 // pred_check_branch
        %205 = sbr.rel (%p203) target = $region20
      $region19: #{_forward_impl.2} parent=11 // pred_region
        _
      $region20: #{_forward_impl.2} parent=11 // pred_fallthru
        _
      // Predicated region
      $region21: #{_forward_impl.2} parent=11 // pred_check
        %p206 = pneg %p115
      $region22: #{_forward_impl.2} parent=11 // pred_check_branch
        %208 = sbr.rel (%p206) target = $region24
      $region23: #{_forward_impl.2} parent=11 // pred_region
        _
      $region24: #{_forward_impl.2} parent=11 // pred_fallthru
        _
      // Predicated region
      $region25: #{_forward_impl.2} parent=11 // pred_check
        %p209 = pneg %p136
      $region26: #{_forward_impl.2} parent=11 // pred_check_branch
        %211 = sbr.rel (%p209) target = $region28
      $region27: #{_forward_impl.2} parent=11 // pred_region
        _
      $region28: #{_forward_impl.2} parent=11 // pred_fallthru
        _
      // Predicated region
      $region29: #{_forward_impl.2} parent=11 // pred_check
        %p212 = pneg %p157
      $region30: #{_forward_impl.2} parent=11 // pred_check_branch
        %214 = sbr.rel (%p212) target = $region32
      $region31: #{_forward_impl.2} parent=11 // pred_region
        _
      $region32: #{_forward_impl.2} parent=11 // pred_fallthru
        _
    $region12: #{_forward_impl.2} parent=5 // pred_fallthru
      _
    %p215 = scmp.lt.s32.totalorder %s12, 2
    // Predicated region
    $region33: #{_forward_impl.2} parent=5 // pred_check
      %p216 = pneg %p215
    $region34: #{_forward_impl.2} parent=5 // pred_check_branch
      %218 = sbr.rel (%p216) target = $region36
    $region35: #{_forward_impl.2} parent=5 // pred_region
      // Predicated region
      $region37: #{_forward_impl.2} parent=35 // pred_check
        %p219 = pneg %p46
      $region38: #{_forward_impl.2} parent=35 // pred_check_branch
        %221 = sbr.rel (%p219) target = $region40
      $region39: #{_forward_impl.2} parent=35 // pred_region
        %p222 = scmp.lt.s32.totalorder %s19, 1
        %s223 = scalar_select %p222, %s19, 1
        %p224 = scmp.lt.s32.totalorder %s20, 0
        %s225 = scalar_select %p224, %s20, 0
        %s226 = smul.addr %s223, 6
        %s227 = sadd.s32 %s225, %s226
        %s228 = smul.addr %s227, 4
        %s229 = scalar_lea.vmem %s0, %s228
      $region40: #{_forward_impl.2} parent=35 // pred_fallthru
        _
    $region36: #{_forward_impl.2} parent=5 // pred_fallthru
      _
    %p230 = scmp.le.s32.totalorder 1, %s12
    %p231 = scmp.lt.s32.totalorder %s12, 3
    %p232 = pnand %p230, %p231
    %p233 = pneg %p232
    // Predicated region
    $region41: #{_forward_impl.2} parent=5 // pred_check
      _
    $region42: #{_forward_impl.2} parent=5 // pred_check_branch
      %235 = sbr.rel (%p232) target = $region44
    $region43: #{_forward_impl.2} parent=5 // pred_region
      %s236 = ssub.s32 %s12, 1
      %p237 = scmp.lt.s32.totalorder %s21, 1
      %s238 = scalar_select %p237, %s21, 1
      %p239 = scmp.lt.s32.totalorder %s22, 0
      %s240 = scalar_select %p239, %s22, 0
      %s241 = smul.addr %s238, 6
      %s242 = sadd.s32 %s240, %s241
      %s243 = smul.addr %s242, 4
      %s244 = scalar_lea.vmem %s0, %s243
      %p245 = pneg %p52
      %p246 = pneg %p49
      %p247 = pneg %p73
      %p248 = pneg %p70
      %p249 = pneg %p94
      %p250 = pneg %p91
      %p251 = pneg %p115
      %p252 = pneg %p112
      %p253 = pneg %p136
      %p254 = pneg %p133
      %p255 = pneg %p157
      %p256 = pneg %p154
      %p257 = pneg %p185
      %p258 = pneg %p182
      %p259 = scmp.lt.s32.totalorder %s21, 1
      %s260 = scalar_select %p259, %s21, 1
      %p261 = scmp.lt.s32.totalorder %s22, 0
      %s262 = scalar_select %p261, %s22, 0
      %s263 = smul.addr %s260, 2
      %s264 = sadd.s32 %s262, %s263
      %s265 = smul.addr %s264, 8
      %s266 = scalar_lea.vmem %s6, %s265
      %p267 = scmp.lt.s32.totalorder %s21, 1
      %s268 = scalar_select %p267, %s21, 1
      %p269 = scmp.lt.s32.totalorder %s22, 0
      %s270 = scalar_select %p269, %s22, 0
      %s271 = smul.addr %s268, 6
      %s272 = sadd.s32 %s270, %s271
      %s273 = smul.addr %s272, 4
      %s274 = scalar_lea.vmem %s0, %s273
      %p275 = scmp.lt.s32.totalorder %s21, 1
      %s276 = scalar_select %p275, %s21, 1
      %p277 = scmp.lt.s32.totalorder %s22, 0
      %s278 = scalar_select %p277, %s22, 0
      %s279 = smul.addr %s276, 2
      %s280 = sadd.s32 %s278, %s279
      %s281 = smul.addr %s280, 8
      %s282 = scalar_lea.vmem %s6, %s281
      %v284 = vld [vmem:[%s274] sm:$0xf]
      %v285 = vld [vmem:[%s274 + $0x4] sm:$0xf]
      %v286 = vld [vmem:[%s274 + $0x8] sm:$0xf]
      %v287 = vld [vmem:[%s274 + $0xc] sm:$0xf]
      %v288 = vld [vmem:[%s274 + $0x10] sm:$0xf]
      %v289 = vld [vmem:[%s274 + $0x14] sm:$0xf]
      %v290 = vld [vmem:[%s1] sm:$0xf]
      %v291 = vld [vmem:[%s1 + $0x4] sm:$0xf]
      %v292 = vld [vmem:[%s1 + $0x8] sm:$0xf]
      %v293 = vld [vmem:[%s1 + $0xc] sm:$0xf]
      %v294 = vld [vmem:[%s1 + $0x10] sm:$0xf]
      %v295 = vld [vmem:[%s1 + $0x14] sm:$0xf]
      %v296 = vld [vmem:[%s1 + $0x18] sm:$0xf]
      %v297 = vld [vmem:[%s1 + $0x1c] sm:$0xf]
      %v298 = vld [vmem:[%s2] sm:$0xff]
      %v299 = vld [vmem:[%s2 + $0x8] sm:$0xff]
      %v300 = vld [vmem:[%s2 + $0x10] sm:$0xff]
      %v301 = vld [vmem:[%s2 + $0x18] sm:$0xff]
      %v302 = vld [vmem:[%s2 + $0x20] sm:$0xff]
      %v303 = vld [vmem:[%s2 + $0x28] sm:$0xff]
      %v304 = vld [vmem:[%s2 + $0x30] sm:$0xff]
      %v305 = vld [vmem:[%s2 + $0x38] sm:$0xff]
      %307 = vset.pattern.permute.xlu0 0
      %308 = vperm.xlu0 %307, %v298
      %v309 = vpop.permute.xlu0 %308
      %312 = vset.pattern.permute.xlu0 0
      %313 = vperm.xlu0 %312, %v299
      %v314 = vpop.permute.xlu0 %313
      %317 = vset.pattern.permute.xlu0 0
      %318 = vperm.xlu0 %317, %v300
      %v319 = vpop.permute.xlu0 %318
      %322 = vset.pattern.permute.xlu0 0
      %323 = vperm.xlu0 %322, %v301
      %v324 = vpop.permute.xlu0 %323
      %327 = vset.pattern.permute.xlu0 0
      %328 = vperm.xlu0 %327, %v302
      %v329 = vpop.permute.xlu0 %328
      %332 = vset.pattern.permute.xlu0 0
      %333 = vperm.xlu0 %332, %v303
      %v334 = vpop.permute.xlu0 %333
      %337 = vset.pattern.permute.xlu0 0
      %338 = vperm.xlu0 %337, %v304
      %v339 = vpop.permute.xlu0 %338
      %342 = vset.pattern.permute.xlu0 0
      %343 = vperm.xlu0 %342, %v305
      %v344 = vpop.permute.xlu0 %343
      %v354 = vunpack.c.l.b16 %v290
      %v355 = vunpack.c.l.b16 %v291
      %v356 = vunpack.c.l.b16 %v292
      %v357 = vunpack.c.l.b16 %v293
      %v358 = vunpack.c.l.b16 %v294
      %v359 = vunpack.c.l.b16 %v295
      %v360 = vunpack.c.l.b16 %v296
      %v361 = vunpack.c.l.b16 %v297
      %v362 = vpack.c.b16 %v355, %v354
      %v363 = vpack.c.b16 %v357, %v356
      %v364 = vpack.c.b16 %v359, %v358
      %v365 = vpack.c.b16 %v361, %v360
      %v372 = vunpack.c.l.b16 %v284
      %v373 = vunpack.c.l.b16 %v285
      %v374 = vunpack.c.l.b16 %v286
      %v375 = vunpack.c.l.b16 %v287
      %v376 = vunpack.c.l.b16 %v288
      %v377 = vunpack.c.l.b16 %v289
      %v378 = vpack.c.b16 %v373, %v372
      %v379 = vpack.c.b16 %v375, %v374
      %v380 = vpack.c.b16 %v377, %v376
      %vm384 = vcmask 392192
      %v386 = vsel %vm384, %v362, 0
      %v389 = vsel %vm384, %v363, 0
      %v392 = vsel %vm384, %v364, 0
      %v395 = vsel %vm384, %v365, 0
      %397 = vmatpush.bf16.msra.mxu0 0
      %398 = vmatpush.bf16.msra.mxu0 0
      %399 = vmatpush.bf16.msra.mxu0 0
      %400 = vmatpush.bf16.msra.mxu0 0
      %401 = vmatpush.bf16.msra.mxu0 0
      %402 = vmatpush.bf16.msra.mxu0 %v380
      %403 = vmatpush.bf16.msra.mxu0 %v379
      %404 = vmatpush.bf16.msra.mxu0 %v378
      %405 = vmatmul.bf16.gmra.mxu0 %v386
      %v406 = vpop.f32.mrf.mxu0
      %v407 = vadd.f32 %v309, %v406
      %v408 = vpop.f32.mrf.mxu0
      %v409 = vadd.f32 %v314, %v408
      %410 = vmatmul.bf16.gmra.mxu0 %v389
      %v411 = vpop.f32.mrf.mxu0
      %v412 = vadd.f32 %v319, %v411
      %v413 = vpop.f32.mrf.mxu0
      %v414 = vadd.f32 %v324, %v413
      %415 = vmatmul.bf16.gmra.mxu0 %v392
      %v416 = vpop.f32.mrf.mxu0
      %v417 = vadd.f32 %v329, %v416
      %v418 = vpop.f32.mrf.mxu0
      %v419 = vadd.f32 %v334, %v418
      %420 = vmatmul.bf16.gmra.mxu0 %v395
      %v421 = vpop.f32.mrf.mxu0
      %v422 = vadd.f32 %v339, %v421
      %v423 = vpop.f32.mrf.mxu0
      %v424 = vadd.f32 %v344, %v423
      %425 = vdwg.mxu0
      %v426 = vmax.f32 %v407, 0.0
      %v427 = vmax.f32 %v409, 0.0
      %v428 = vmax.f32 %v412, 0.0
      %v429 = vmax.f32 %v414, 0.0
      %v430 = vmax.f32 %v417, 0.0
      %v431 = vmax.f32 %v419, 0.0
      %v432 = vmax.f32 %v422, 0.0
      %v433 = vmax.f32 %v424, 0.0
      %v434 = vld [vmem:[%s3] sm:$0xf]
      %v435 = vld [vmem:[%s3 + $0x4] sm:$0xf]
      %v436 = vld [vmem:[%s3 + $0x8] sm:$0xf]
      %v437 = vld [vmem:[%s3 + $0xc] sm:$0xf]
      %v438 = vld [vmem:[%s3 + $0x10] sm:$0xf]
      %v439 = vld [vmem:[%s3 + $0x14] sm:$0xf]
      %v440 = vld [vmem:[%s3 + $0x18] sm:$0xf]
      %v441 = vld [vmem:[%s3 + $0x1c] sm:$0xf]
      %v442 = vld [vmem:[%s3 + $0x20] sm:$0xf]
      %v443 = vld [vmem:[%s3 + $0x24] sm:$0xf]
      %v444 = vld [vmem:[%s3 + $0x28] sm:$0xf]
      %v445 = vld [vmem:[%s3 + $0x2c] sm:$0xf]
      %v446 = vld [vmem:[%s3 + $0x30] sm:$0xf]
      %v447 = vld [vmem:[%s3 + $0x34] sm:$0xf]
      %v448 = vld [vmem:[%s3 + $0x38] sm:$0xf]
      %v449 = vld [vmem:[%s3 + $0x3c] sm:$0xf]
      %v450 = vld [vmem:[%s3 + $0x40] sm:$0xf]
      %v451 = vpack.c.bf16 %v427, %v426
      %v452 = vpack.c.bf16 %v429, %v428
      %v453 = vpack.c.bf16 %v431, %v430
      %v454 = vpack.c.bf16 %v433, %v432
      %v455 = vld [vmem:[%s4] sm:$0xff]
      %v456 = vld [vmem:[%s4 + $0x8] sm:$0xff]
      %v457 = vld [vmem:[%s4 + $0x10] sm:$0xff]
      %v458 = vld [vmem:[%s4 + $0x18] sm:$0xff]
      %v459 = vld [vmem:[%s4 + $0x20] sm:$0xff]
      %v460 = vld [vmem:[%s4 + $0x28] sm:$0xff]
      %v461 = vld [vmem:[%s4 + $0x30] sm:$0xff]
      %v462 = vld [vmem:[%s4 + $0x38] sm:$0xff]
      %v463 = vld [vmem:[%s4 + $0x40] sm:$0xff]
      %v464 = vld [vmem:[%s4 + $0x48] sm:$0xff]
      %v465 = vld [vmem:[%s4 + $0x50] sm:$0xff]
      %v466 = vld [vmem:[%s4 + $0x58] sm:$0xff]
      %v467 = vld [vmem:[%s4 + $0x60] sm:$0xff]
      %v468 = vld [vmem:[%s4 + $0x68] sm:$0xff]
      %v469 = vld [vmem:[%s4 + $0x70] sm:$0xff]
      %v470 = vld [vmem:[%s4 + $0x78] sm:$0xff]
      %v471 = vld [vmem:[%s4 + $0x80] sm:$0xff]
      %473 = vset.pattern.permute.xlu0 0
      %474 = vperm.xlu0 %473, %v455
      %v475 = vpop.permute.xlu0 %474
      %478 = vset.pattern.permute.xlu0 0
      %479 = vperm.xlu0 %478, %v456
      %v480 = vpop.permute.xlu0 %479
      %483 = vset.pattern.permute.xlu0 0
      %484 = vperm.xlu0 %483, %v457
      %v485 = vpop.permute.xlu0 %484
      %488 = vset.pattern.permute.xlu0 0
      %489 = vperm.xlu0 %488, %v458
      %v490 = vpop.permute.xlu0 %489
      %493 = vset.pattern.permute.xlu0 0
      %494 = vperm.xlu0 %493, %v459
      %v495 = vpop.permute.xlu0 %494
      %498 = vset.pattern.permute.xlu0 0
      %499 = vperm.xlu0 %498, %v460
      %v500 = vpop.permute.xlu0 %499
      %503 = vset.pattern.permute.xlu0 0
      %504 = vperm.xlu0 %503, %v461
      %v505 = vpop.permute.xlu0 %504
      %508 = vset.pattern.permute.xlu0 0
      %509 = vperm.xlu0 %508, %v462
      %v510 = vpop.permute.xlu0 %509
      %513 = vset.pattern.permute.xlu0 0
      %514 = vperm.xlu0 %513, %v463
      %v515 = vpop.permute.xlu0 %514
      %518 = vset.pattern.permute.xlu0 0
      %519 = vperm.xlu0 %518, %v464
      %v520 = vpop.permute.xlu0 %519
      %523 = vset.pattern.permute.xlu0 0
      %524 = vperm.xlu0 %523, %v465
      %v525 = vpop.permute.xlu0 %524
      %528 = vset.pattern.permute.xlu0 0
      %529 = vperm.xlu0 %528, %v466
      %v530 = vpop.permute.xlu0 %529
      %533 = vset.pattern.permute.xlu0 0
      %534 = vperm.xlu0 %533, %v467
      %v535 = vpop.permute.xlu0 %534
      %538 = vset.pattern.permute.xlu0 0
      %539 = vperm.xlu0 %538, %v468
      %v540 = vpop.permute.xlu0 %539
      %543 = vset.pattern.permute.xlu0 0
      %544 = vperm.xlu0 %543, %v469
      %v545 = vpop.permute.xlu0 %544
      %548 = vset.pattern.permute.xlu0 0
      %549 = vperm.xlu0 %548, %v470
      %v550 = vpop.permute.xlu0 %549
      %553 = vset.pattern.permute.xlu0 0
      %554 = vperm.xlu0 %553, %v471
      %v555 = vpop.permute.xlu0 %554
      %v574 = vunpack.c.l.b16 %v434
      %v575 = vunpack.c.l.b16 %v435
      %v576 = vunpack.c.l.b16 %v436
      %v577 = vunpack.c.l.b16 %v437
      %v578 = vunpack.c.l.b16 %v438
      %v579 = vunpack.c.l.b16 %v439
      %v580 = vunpack.c.l.b16 %v440
      %v581 = vunpack.c.l.b16 %v441
      %v582 = vunpack.c.l.b16 %v442
      %v583 = vunpack.c.l.b16 %v443
      %v584 = vunpack.c.l.b16 %v444
      %v585 = vunpack.c.l.b16 %v445
      %v586 = vunpack.c.l.b16 %v446
      %v587 = vunpack.c.l.b16 %v447
      %v588 = vunpack.c.l.b16 %v448
      %v589 = vunpack.c.l.b16 %v449
      %v590 = vunpack.c.l.b16 %v450
      %v591 = vpack.c.b16 %v575, %v574
      %v592 = vpack.c.b16 %v577, %v576
      %v593 = vpack.c.b16 %v579, %v578
      %v594 = vpack.c.b16 %v581, %v580
      %v595 = vpack.c.b16 %v583, %v582
      %v596 = vpack.c.b16 %v585, %v584
      %v597 = vpack.c.b16 %v587, %v586
      %v598 = vpack.c.b16 %v589, %v588
      %v599 = vpack.c.b16 %v590, %v590
      %vm600 = vcmask 523264
      %v602 = vsel %vm600, %v591, 0
      %v605 = vsel %vm600, %v592, 0
      %v608 = vsel %vm600, %v593, 0
      %v611 = vsel %vm600, %v594, 0
      %v614 = vsel %vm600, %v595, 0
      %v617 = vsel %vm600, %v596, 0
      %v620 = vsel %vm600, %v597, 0
      %v623 = vsel %vm600, %v598, 0
      %v626 = vsel %vm600, %v599, 0
      %628 = vmatpush.bf16.msra.mxu0 0
      %629 = vmatpush.bf16.msra.mxu0 0
      %630 = vmatpush.bf16.msra.mxu0 0
      %631 = vmatpush.bf16.msra.mxu0 0
      %632 = vmatpush.bf16.msra.mxu0 %v454
      %633 = vmatpush.bf16.msra.mxu0 %v453
      %634 = vmatpush.bf16.msra.mxu0 %v452
      %635 = vmatpush.bf16.msra.mxu0 %v451
      %636 = vmatmul.bf16.gmra.mxu0 %v602
      %v637 = vpop.f32.mrf.mxu0
      %v638 = vadd.f32 %v475, %v637
      %v639 = vpop.f32.mrf.mxu0
      %v640 = vadd.f32 %v480, %v639
      %641 = vmatmul.bf16.gmra.mxu0 %v605
      %v642 = vpop.f32.mrf.mxu0
      %v643 = vadd.f32 %v485, %v642
      %v644 = vpop.f32.mrf.mxu0
      %v645 = vadd.f32 %v490, %v644
      %646 = vmatmul.bf16.gmra.mxu0 %v608
      %v647 = vpop.f32.mrf.mxu0
      %v648 = vadd.f32 %v495, %v647
      %v649 = vpop.f32.mrf.mxu0
      %v650 = vadd.f32 %v500, %v649
      %651 = vmatmul.bf16.gmra.mxu0 %v611
      %v652 = vpop.f32.mrf.mxu0
      %v653 = vadd.f32 %v505, %v652
      %v654 = vpop.f32.mrf.mxu0
      %v655 = vadd.f32 %v510, %v654
      %656 = vmatmul.bf16.gmra.mxu0 %v614
      %v657 = vpop.f32.mrf.mxu0
      %v658 = vadd.f32 %v515, %v657
      %v659 = vpop.f32.mrf.mxu0
      %v660 = vadd.f32 %v520, %v659
      %661 = vmatmul.bf16.gmra.mxu0 %v617
      %v662 = vpop.f32.mrf.mxu0
      %v663 = vadd.f32 %v525, %v662
      %v664 = vpop.f32.mrf.mxu0
      %v665 = vadd.f32 %v530, %v664
      %666 = vmatmul.bf16.gmra.mxu0 %v620
      %v667 = vpop.f32.mrf.mxu0
      %v668 = vadd.f32 %v535, %v667
      %v669 = vpop.f32.mrf.mxu0
      %v670 = vadd.f32 %v540, %v669
      %671 = vmatmul.bf16.gmra.mxu0 %v623
      %v672 = vpop.f32.mrf.mxu0
      %v673 = vadd.f32 %v545, %v672
      %v674 = vpop.f32.mrf.mxu0
      %v675 = vadd.f32 %v550, %v674
      %676 = vmatmul.bf16.gmra.mxu0 %v626
      %v677 = vpop.f32.mrf.mxu0
      %v678 = vadd.f32 %v555, %v677
      %v679 = vpop.f32.mrf.mxu0
      %680 = vdwg.mxu0
      %v681 = vmul.f32 %v640, %v640
      %v682 = vmul.f32 %v643, %v643
      %v683 = vmul.f32 %v645, %v645
      %v684 = vmul.f32 %v648, %v648
      %v685 = vmul.f32 %v650, %v650
      %v686 = vmul.f32 %v653, %v653
      %v687 = vmul.f32 %v655, %v655
      %v688 = vmul.f32 %v658, %v658
      %v689 = vmul.f32 %v660, %v660
      %v690 = vmul.f32 %v663, %v663
      %v691 = vmul.f32 %v665, %v665
      %v692 = vmul.f32 %v668, %v668
      %v693 = vmul.f32 %v670, %v670
      %v694 = vmul.f32 %v673, %v673
      %v695 = vmul.f32 %v675, %v675
      %v696 = vmul.f32 %v678, %v678
      %vm697 = vcmask 130048
      %v698 = vsel %vm697, %v681, 0.0
      %v699 = vsel %vm697, %v682, 0.0
      %v700 = vadd.f32 %v698, %v699
      %v701 = vsel %vm697, %v683, 0.0
      %v702 = vadd.f32 %v700, %v701
      %v703 = vsel %vm697, %v684, 0.0
      %v704 = vadd.f32 %v702, %v703
      %v705 = vsel %vm697, %v685, 0.0
      %v706 = vadd.f32 %v704, %v705
      %v707 = vsel %vm697, %v686, 0.0
      %v708 = vadd.f32 %v706, %v707
      %v709 = vsel %vm697, %v687, 0.0
      %v710 = vadd.f32 %v708, %v709
      %v711 = vsel %vm697, %v688, 0.0
      %v712 = vadd.f32 %v710, %v711
      %v713 = vsel %vm697, %v689, 0.0
      %v714 = vadd.f32 %v712, %v713
      %v715 = vsel %vm697, %v690, 0.0
      %v716 = vadd.f32 %v714, %v715
      %v717 = vsel %vm697, %v691, 0.0
      %v718 = vadd.f32 %v716, %v717
      %v719 = vsel %vm697, %v692, 0.0
      %v720 = vadd.f32 %v718, %v719
      %v721 = vsel %vm697, %v693, 0.0
      %v722 = vadd.f32 %v720, %v721
      %v723 = vsel %vm697, %v694, 0.0
      %v724 = vadd.f32 %v722, %v723
      %v725 = vsel %vm697, %v695, 0.0
      %v726 = vadd.f32 %v724, %v725
      %v727 = vsel %vm697, %v696, 0.0
      %v728 = vadd.f32 %v726, %v727
      %v729 = vrot.slane %v728, 4
      %v730 = vadd.f32 %v728, %v729
      %v731 = vrot.slane %v730, 2
      %v732 = vadd.f32 %v730, %v731
      %v733 = vrot.slane %v732, 1
      %v734 = vadd.f32 %v732, %v733
      %v735 = vadd.f32 %v734, 1e-24
      %v736 = vrsqrt.pop %v735
      %v737 = vmul.f32 %v736, %v735
      %v738 = vmul.f32 %v737, %v736
      %v739 = vmul.f32 0.5, %v738
      %v740 = vsub.f32 1.5, %v739
      %v741 = vmul.f32 %v736, %v740
      %vm742 = vweird.f32 %v735
      %vm743 = vweird.f32 %v736
      %vm744 = vmor %vm742, %vm743
      %v745 = vsel %vm744, %v736, %v741
      %v746 = vmul.f32 %v640, %v745
      %v747 = vmul.f32 %v643, %v745
      %v748 = vmul.f32 %v645, %v745
      %v749 = vmul.f32 %v648, %v745
      %v750 = vmul.f32 %v650, %v745
      %v751 = vmul.f32 %v653, %v745
      %v752 = vmul.f32 %v655, %v745
      %v753 = vmul.f32 %v658, %v745
      %v754 = vmul.f32 %v660, %v745
      %v755 = vmul.f32 %v663, %v745
      %v756 = vmul.f32 %v665, %v745
      %v757 = vmul.f32 %v668, %v745
      %v758 = vmul.f32 %v670, %v745
      %v759 = vmul.f32 %v673, %v745
      %v760 = vmul.f32 %v675, %v745
      %v761 = vmul.f32 %v678, %v745
      %v762 = vld [vmem:[%s5] sm:$0xf]
      %v763 = vpack.c.bf16 %v747, %v746
      %v764 = vpack.c.bf16 %v749, %v748
      %v765 = vpack.c.bf16 %v751, %v750
      %v766 = vpack.c.bf16 %v753, %v752
      %v767 = vpack.c.bf16 %v755, %v754
      %v768 = vpack.c.bf16 %v757, %v756
      %v769 = vpack.c.bf16 %v759, %v758
      %v770 = vpack.c.bf16 %v761, %v760
      %771 = vmatpush.bf16.msra.mxu0 %v770
      %772 = vmatpush.bf16.msra.mxu0 %v769
      %773 = vmatpush.bf16.msra.mxu0 %v768
      %774 = vmatpush.bf16.msra.mxu0 %v767
      %775 = vmatpush.bf16.msra.mxu0 %v766
      %776 = vmatpush.bf16.msra.mxu0 %v765
      %777 = vmatpush.bf16.msra.mxu0 %v764
      %778 = vmatpush.bf16.msra.mxu0 %v763
      %779 = vmatmul.bf16.gmra.mxu0 %v762
      %v780 = vpop.f32.mrf.mxu0
      %v781 = vadd.f32 0.0, %v780
      %v782 = vpop.f32.mrf.mxu0
      %783 = vdwg.mxu0
      %v784 = vsel %vm697, %v781, -inf
      %v785 = vrot.slane %v784, 4
      %v786 = vmax.f32 %v784, %v785
      %v787 = vrot.slane %v786, 2
      %v788 = vmax.f32 %v786, %v787
      %v789 = vrot.slane %v788, 1
      %v790 = vmax.f32 %v788, %v789
      %v791 = vsub.f32 %v781, %v790
      %v792 = vmul.f32 %v791, 1.442695
      %v793 = vpow.pop %v792
      %v794 = vsel %vm697, %v793, 0.0
      %v795 = vrot.slane %v794, 4
      %v796 = vadd.f32 %v794, %v795
      %v797 = vrot.slane %v796, 2
      %v798 = vadd.f32 %v796, %v797
      %v799 = vrot.slane %v798, 1
      %v800 = vadd.f32 %v798, %v799
      %v801 = vrcp.pop %v800
      %v802 = vmul.f32 %v793, %v801
      %803 = vst.msk [vmem:[%s282] sm:$0xff] %vm697, %v638
      %804 = vst.msk [vmem:[%s282 + $0x8] sm:$0xff] %vm697, %v802
      %p805 = scmp.lt.s32.totalorder %s21, 1
      %s806 = scalar_select %p805, %s21, 1
      %p807 = scmp.lt.s32.totalorder %s22, 0
      %s808 = scalar_select %p807, %s22, 0
      %s809 = smul.addr %s806, 2
      %s810 = sadd.s32 %s808, %s809
      %s811 = smul.addr %s810, 8
      %s812 = scalar_lea.vmem %s6, %s811
      // Predicated region
      $region45: #{_forward_impl.2} parent=43 // pred_check
        %p813 = pneg %p182
      $region46: #{_forward_impl.2} parent=43 // pred_check_branch
        %815 = sbr.rel (%p813) target = $region48
      $region47: #{_forward_impl.2} parent=43 // pred_region
        _
      $region48: #{_forward_impl.2} parent=43 // pred_fallthru
        _
    $region44: #{_forward_impl.2} parent=5 // pred_fallthru
      _
    %p816 = scmp.le.s32.totalorder 2, %s12
    // Predicated region
    $region49: #{_forward_impl.2} parent=5 // pred_check
      %p817 = pneg %p816
    $region50: #{_forward_impl.2} parent=5 // pred_check_branch
      %819 = sbr.rel (%p817) target = $region52
    $region51: #{_forward_impl.2} parent=5 // pred_region
      %s820 = ssub.s32 %s12, 2
      // Predicated region
      $region53: #{_forward_impl.2} parent=51 // pred_check
        %p821 = pneg %p188
      $region54: #{_forward_impl.2} parent=51 // pred_check_branch
        %823 = sbr.rel (%p821) target = $region56
      $region55: #{_forward_impl.2} parent=51 // pred_region
        %p824 = scmp.lt.s32.totalorder %s23, 1
        %s825 = scalar_select %p824, %s23, 1
        %p826 = scmp.lt.s32.totalorder %s24, 0
        %s827 = scalar_select %p826, %s24, 0
        %s828 = smul.addr %s825, 2
        %s829 = sadd.s32 %s827, %s828
        %s830 = smul.addr %s829, 8
        %s831 = scalar_lea.vmem %s6, %s830
      $region56: #{_forward_impl.2} parent=51 // pred_fallthru
        _
    $region52: #{_forward_impl.2} parent=5 // pred_fallthru
      _
  $region6: #{_forward_impl.2} parent=0 // loop_footer
    %s16 = sadd.s32 1, %s12
  $region7: #{_forward_impl.2} parent=0 // loop_footer_branch
    %11 = sbr.rel target = $region3
  $region8: #{_forward_impl.2} parent=0 // loop_exit
    _

// kernel: _forward_impl.3
$region0: #{_forward_impl.3}
  #allocation0 [shape = 'u32[]', space=smem, size = 0x4, offset = 0x4, fixed_abs, tag = 'smem constant byte address 0x4 - core index']
  #allocation1 [shape = 'u32[72,128]{1,0:T(1,128)}', space=vmem, size = 0x9000, scoped, tag = 'internal scratch']
  %s0 = inlined_call_operand.vmem [shape: f32[2,16,4,4], index: 0, kind: input, shape index: {}]
  %s1 = inlined_call_operand.vmem [shape: f32[4,16], index: 1, kind: input, shape index: {}, may-alias: {1,2}]
  %s2 = inlined_call_operand.vmem [shape: f32[4,16], index: 2, kind: input, shape index: {}, may-alias: {1,2}]
  %s3 = inlined_call_operand.hbm [shape: f32[2,8,16,16], index: 3, kind: output, shape index: {0}]
  %s4 = inlined_call_operand.hbm [shape: f32[2,8,16,16], index: 4, kind: output, shape index: {1}]
  %5 = xla_tuple %s3, %s4
  %s6 = sld [smem:[#allocation0]]
  $region53: #{_forward_impl.3} parent=0
    _
  %s8 = ssub.s32 1, %s6
  %s9 = scalar_select 0, %s8, %s6
  $region1: #{_forward_impl.3} parent=0
    #allocation2 [shape = 'u8[131072]{0}', space=vmem, size = 0x20000, scoped, tag = 'output window, operand 0']
    #allocation3 [shape = 's32[2]{0}', space=sflag, size = 0x8, scoped, tag = 'scoped memory for _forward_impl.3']
    #allocation4 [shape = 'u8[131072]{0}', space=vmem, size = 0x20000, scoped, tag = 'output window, operand 1']
    #allocation5 [shape = 's32[2]{0}', space=sflag, size = 0x8, scoped, tag = 'scoped memory for _forward_impl.3']
    %10 = vsyncpa [#allocation3], 0
    %s11 = scalar_lea.sflag [#allocation3], 1
    %12 = vsyncpa %s11, 0
    %13 = vsyncpa [#allocation5], 0
    %s14 = scalar_lea.sflag [#allocation5], 1
    %15 = vsyncpa %s14, 0
    loop: start=0, step=1, limit=4
    $region2: #{_forward_impl.3} parent=1 // loop_pre_header
      _
    $region3: #{_forward_impl.3} parent=1 // loop_header
      %s17 = sphi 0, %s21
      %p18 = scmp.ge.s32.totalorder %s17, 4
      %s24 = sphi 0, %s36
      %s25 = sphi 0, %s32
      %s26 = sphi 0, %s24
      %s27 = sphi 0, %s25
      %s28 = sphi 0, %s26
      %s29 = sphi 0, %s27
      %s39 = sphi 0, %s41
      %s42 = sphi 0, %s39
      %s43 = sphi 0, %s42
      %s59 = sphi 0, %s43
      %s65 = sphi 0, %s67
      %s68 = sphi 0, %s65
      %s69 = sphi 0, %s68
      %s85 = sphi 0, %s69
      %s89 = sphi 0, %s89
      %s91 = sphi 0, %s89
      %s92 = sphi 0, %s91
      %s106 = sphi 0, %s92
      %s114 = sphi 0, %s116
      %s117 = sphi 0, %s114
      %s118 = sphi 0, %s117
      %s134 = sphi 0, %s118
      %s142 = sphi 0, %s144
      %s145 = sphi 0, %s142
      %s146 = sphi 0, %s145
      %s162 = sphi 0, %s146
    $region4: #{_forward_impl.3} parent=1 // loop_header_branch
      %20 = sbr.rel (%p18) target = $region8
    $region5: #{_forward_impl.3} parent=1 // loop_body
      %s22 = ssub.s32 %s17, 1
      %s23 = ssub.s32 %s17, 2
      %s30 = sadd.s32 1, %s25
      %p31 = scmp.ge.s32.totalorder %s30, 1
      %s32 = scalar_select %p31, 0, %s30
      %s33 = sadd.s32 1, %s24
      %s34 = scalar_select %p31, %s33, %s24
      %p35 = scmp.ge.s32.totalorder %s34, 2
      %s36 = scalar_select %p35, 0, %s34
      %s37 = ssub.s32 %s24, %s36
      %p38 = scmp.eq.s32.totalorder %s37, 0
      %s40 = sadd.s32 %s39, 1
      %s41 = scalar_select %p38, %s39, %s40
      %p44 = pneg %p38
      %p45 = scmp.eq.s32.totalorder %s17, 1
      %p46 = por %p44, %p45
      %p47 = scmp.ne.s32.totalorder %s39, %s42
      %p48 = scmp.eq.s32.totalorder %s17, 0
      %p49 = por %p47, %p48
      %p50 = scmp.ne.s32.totalorder %s39, %s42
      %p51 = scmp.eq.s32.totalorder %s22, 1
      %p52 = por %p50, %p51
      %p53 = scmp.ne.s32.totalorder %s42, %s43
      %p54 = scmp.eq.s32.totalorder %s22, 0
      %p55 = por %p53, %p54
      %p56 = scmp.ne.s32.totalorder %s42, %s43
      %p57 = scmp.eq.s32.totalorder %s23, 1
      %p58 = por %p56, %p57
      %p60 = scmp.ne.s32.totalorder %s43, %s59
      %p61 = scmp.eq.s32.totalorder %s23, 0
      %p62 = por %p60, %p61
      %s63 = ssub.s32 %s25, %s32
      %p64 = scmp.eq.s32.totalorder %s63, 0
      %s66 = sadd.s32 %s65, 1
      %s67 = scalar_select %p64, %s65, %s66
      %p70 = pneg %p64
      %p71 = scmp.eq.s32.totalorder %s17, 1
      %p72 = por %p70, %p71
      %p73 = scmp.ne.s32.totalorder %s65, %s68
      %p74 = scmp.eq.s32.totalorder %s17, 0
      %p75 = por %p73, %p74
      %p76 = scmp.ne.s32.totalorder %s65, %s68
      %p77 = scmp.eq.s32.totalorder %s22, 1
      %p78 = por %p76, %p77
      %p79 = scmp.ne.s32.totalorder %s68, %s69
      %p80 = scmp.eq.s32.totalorder %s22, 0
      %p81 = por %p79, %p80
      %p82 = scmp.ne.s32.totalorder %s68, %s69
      %p83 = scmp.eq.s32.totalorder %s23, 1
      %p84 = por %p82, %p83
      %p86 = scmp.ne.s32.totalorder %s69, %s85
      %p87 = scmp.eq.s32.totalorder %s23, 0
      %p88 = por %p86, %p87
      %s90 = sadd.s32 %s89, 1
      %p93 = scmp.eq.s32.totalorder %s17, 1
      %p94 = scmp.ne.s32.totalorder %s89, %s91
      %p95 = scmp.eq.s32.totalorder %s17, 0
      %p96 = por %p94, %p95
      %p97 = scmp.ne.s32.totalorder %s89, %s91
      %p98 = scmp.eq.s32.totalorder %s22, 1
      %p99 = por %p97, %p98
      %p100 = scmp.ne.s32.totalorder %s91, %s92
      %p101 = scmp.eq.s32.totalorder %s22, 0
      %p102 = por %p100, %p101
      %p103 = scmp.ne.s32.totalorder %s91, %s92
      %p104 = scmp.eq.s32.totalorder %s23, 1
      %p105 = por %p103, %p104
      %p107 = scmp.ne.s32.totalorder %s92, %s106
      %p108 = scmp.eq.s32.totalorder %s23, 0
      %p109 = por %p107, %p108
      %s110 = ssub.s32 %s24, %s36
      %s111 = ssub.s32 %s25, %s32
      %s112 = sor.u32 %s110, %s111
      %p113 = scmp.eq.s32.totalorder %s112, 0
      %s115 = sadd.s32 %s114, 1
      %s116 = scalar_select %p113, %s114, %s115
      %p119 = pneg %p113
      %p120 = scmp.eq.s32.totalorder %s17, 1
      %p121 = por %p119, %p120
      %p122 = scmp.ne.s32.totalorder %s114, %s117
      %p123 = scmp.eq.s32.totalorder %s17, 0
      %p124 = por %p122, %p123
      %p125 = scmp.ne.s32.totalorder %s114, %s117
      %p126 = scmp.eq.s32.totalorder %s22, 1
      %p127 = por %p125, %p126
      %p128 = scmp.ne.s32.totalorder %s117, %s118
      %p129 = scmp.eq.s32.totalorder %s22, 0
      %p130 = por %p128, %p129
      %p131 = scmp.ne.s32.totalorder %s117, %s118
      %p132 = scmp.eq.s32.totalorder %s23, 1
      %p133 = por %p131, %p132
      %p135 = scmp.ne.s32.totalorder %s118, %s134
      %p136 = scmp.eq.s32.totalorder %s23, 0
      %p137 = por %p135, %p136
      %s138 = ssub.s32 %s24, %s36
      %s139 = ssub.s32 %s25, %s32
      %s140 = sor.u32 %s138, %s139
      %p141 = scmp.eq.s32.totalorder %s140, 0
      %s143 = sadd.s32 %s142, 1
      %s144 = scalar_select %p141, %s142, %s143
      %p147 = pneg %p141
      %p148 = scmp.eq.s32.totalorder %s17, 1
      %p149 = por %p147, %p148
      %p150 = scmp.ne.s32.totalorder %s142, %s145
      %p151 = scmp.eq.s32.totalorder %s17, 0
      %p152 = por %p150, %p151
      %p153 = scmp.ne.s32.totalorder %s142, %s145
      %p154 = scmp.eq.s32.totalorder %s22, 1
      %p155 = por %p153, %p154
      %p156 = scmp.ne.s32.totalorder %s145, %s146
      %p157 = scmp.eq.s32.totalorder %s22, 0
      %p158 = por %p156, %p157
      %p159 = scmp.ne.s32.totalorder %s145, %s146
      %p160 = scmp.eq.s32.totalorder %s23, 1
      %p161 = por %p159, %p160
      %p163 = scmp.ne.s32.totalorder %s146, %s162
      %p164 = scmp.eq.s32.totalorder %s23, 0
      %p165 = por %p163, %p164
      %p166 = scmp.le.s32.totalorder 1, %s17
      %p167 = scmp.lt.s32.totalorder %s17, 3
      %p168 = pnand %p166, %p167
      %p169 = pneg %p168
      // Predicated region
      $region9: #{_forward_impl.3} parent=5 // pred_check
        _
      $region10: #{_forward_impl.3} parent=5 // pred_check_branch
        %171 = sbr.rel (%p168) target = $region12
      $region11: #{_forward_impl.3} parent=5 // pred_region
        %s172 = ssub.s32 %s17, 1
        // Predicated region
        $region13: #{_forward_impl.3} parent=11 // pred_check
          %p173 = pneg %p81
        $region14: #{_forward_impl.3} parent=11 // pred_check_branch
          %175 = sbr.rel (%p173) target = $region16
        $region15: #{_forward_impl.3} parent=11 // pred_region
          %p176 = scmp.lt.s32.totalorder %s27, 0
          %s177 = scalar_select %p176, %s27, 0
          %s178 = smul.addr %s177, 4
          %s179 = scalar_lea.vmem %s1, %s178
        $region16: #{_forward_impl.3} parent=11 // pred_fallthru
          _
        // Predicated region
        $region17: #{_forward_impl.3} parent=11 // pred_check
          %p180 = pneg %p102
        $region18: #{_forward_impl.3} parent=11 // pred_check_branch
          %182 = sbr.rel (%p180) target = $region20
        $region19: #{_forward_impl.3} parent=11 // pred_region
          _
        $region20: #{_forward_impl.3} parent=11 // pred_fallthru
          _
      $region12: #{_forward_impl.3} parent=5 // pred_fallthru
        _
      %p183 = scmp.lt.s32.totalorder %s17, 2
      // Predicated region
      $region21: #{_forward_impl.3} parent=5 // pred_check
        %p184 = pneg %p183
      $region22: #{_forward_impl.3} parent=5 // pred_check_branch
        %186 = sbr.rel (%p184) target = $region24
      $region23: #{_forward_impl.3} parent=5 // pred_region
        // Predicated region
        $region25: #{_forward_impl.3} parent=23 // pred_check
          %p187 = pneg %p49
        $region26: #{_forward_impl.3} parent=23 // pred_check_branch
          %189 = sbr.rel (%p187) target = $region28
        $region27: #{_forward_impl.3} parent=23 // pred_region
          %p190 = scmp.lt.s32.totalorder %s24, 1
          %s191 = scalar_select %p190, %s24, 1
          %s192 = smul.addr %s191, 16
          %s193 = smul.addr %s192, 4
          %s194 = scalar_lea.vmem %s0, %s193
        $region28: #{_forward_impl.3} parent=23 // pred_fallthru
          _
      $region24: #{_forward_impl.3} parent=5 // pred_fallthru
        _
      %p195 = scmp.le.s32.totalorder 1, %s17
      %p196 = scmp.lt.s32.totalorder %s17, 3
      %p197 = pnand %p195, %p196
      %p198 = pneg %p197
      // Predicated region
      $region29: #{_forward_impl.3} parent=5 // pred_check
        _
      $region30: #{_forward_impl.3} parent=5 // pred_check_branch
        %200 = sbr.rel (%p197) target = $region32
      $region31: #{_forward_impl.3} parent=5 // pred_region
        %s201 = ssub.s32 %s17, 1
        %p202 = scmp.lt.s32.totalorder %s26, 1
        %s203 = scalar_select %p202, %s26, 1
        %s204 = smul.addr %s203, 16
        %s205 = smul.addr %s204, 4
        %s206 = scalar_lea.vmem %s0, %s205
        %p207 = pneg %p55
        %p208 = pneg %p52
        %p209 = scmp.lt.s32.totalorder %s27, 0
        %s210 = scalar_select %p209, %s27, 0
        %s211 = smul.addr %s210, 4
        %s212 = scalar_lea.vmem %s1, %s211
        %p213 = pneg %p81
        %p214 = pneg %p78
        %p215 = pneg %p102
        %p216 = pneg %p99
        %p217 = pneg %p130
        %p218 = pneg %p127
        %s219 = sand.u32 %s117, 1
        %s220 = scalar_lea.sflag [#allocation3], %s219
        %s221 = sand.u32 %s117, 1
        %s222 = smul.addr %s221, 128
        %s223 = scalar_lea.vmem [#allocation2], %s222
        %p224 = pneg %p158
        %p225 = pneg %p155
        %s226 = sand.u32 %s145, 1
        %s227 = scalar_lea.sflag [#allocation5], %s226
        %s228 = sand.u32 %s145, 1
        %s229 = smul.addr %s228, 128
        %s230 = scalar_lea.vmem [#allocation4], %s229
        %p231 = scmp.lt.s32.totalorder %s26, 1
        %s232 = scalar_select %p231, %s26, 1
        %s233 = smul.addr %s232, 16
        %s234 = smul.addr %s233, 4
        %s235 = scalar_lea.vmem %s0, %s234
        %p236 = scmp.lt.s32.totalorder %s27, 0
        %s237 = scalar_select %p236, %s27, 0
        %s238 = smul.addr %s237, 4
        %s239 = scalar_lea.vmem %s1, %s238
        %s240 = smul.u32 2, %s27
        %s241 = smul.u32 2, %s27
        %v242 = vld [vmem:[%s235] sm:$0xf]
        %v243 = vld [vmem:[%s235 + $0x4] sm:$0xf]
        %v244 = vld [vmem:[%s235 + $0x8] sm:$0xf]
        %v245 = vld [vmem:[%s235 + $0xc] sm:$0xf]
        %v246 = vld [vmem:[%s235 + $0x10] sm:$0xf]
        %v247 = vld [vmem:[%s235 + $0x14] sm:$0xf]
        %v248 = vld [vmem:[%s235 + $0x18] sm:$0xf]
        %v249 = vld [vmem:[%s235 + $0x1c] sm:$0xf]
        %v250 = vld [vmem:[%s235 + $0x20] sm:$0xf]
        %v251 = vld [vmem:[%s235 + $0x24] sm:$0xf]
        %v252 = vld [vmem:[%s235 + $0x28] sm:$0xf]
        %v253 = vld [vmem:[%s235 + $0x2c] sm:$0xf]
        %v254 = vld [vmem:[%s235 + $0x30] sm:$0xf]
        %v255 = vld [vmem:[%s235 + $0x34] sm:$0xf]
        %v256 = vld [vmem:[%s235 + $0x38] sm:$0xf]
        %v257 = vld [vmem:[%s235 + $0x3c] sm:$0xf]
        %v258 = vld [vmem:[%s239] sm:$0xf]
        %v259 = vld [vmem:[%s2] sm:$0xf]
        %260 = vxpose.xlu0.b32.start [1/16] %v242, 128
        %261 = vxpose.xlu0.b32.cont [2/16] 0.0, 128
        %262 = vxpose.xlu0.b32.cont [3/16] 0.0, 128
        %263 = vxpose.xlu0.b32.cont [4/16] 0.0, 128
        %264 = vxpose.xlu0.b32.cont [5/16] 0.0, 128
        %265 = vxpose.xlu0.b32.cont [6/16] 0.0, 128
        %266 = vxpose.xlu0.b32.cont [7/16] 0.0, 128
        %267 = vxpose.xlu0.b32.cont [8/16] 0.0, 128
        %268 = vxpose.xlu0.b32.cont [9/16] 0.0, 128
        %269 = vxpose.xlu0.b32.cont [10/16] 0.0, 128
        %270 = vxpose.xlu0.b32.cont [11/16] 0.0, 128
        %271 = vxpose.xlu0.b32.cont [12/16] 0.0, 128
        %272 = vxpose.xlu0.b32.cont [13/16] 0.0, 128
        %273 = vxpose.xlu0.b32.cont [14/16] 0.0, 128
        %274 = vxpose.xlu0.b32.cont [15/16] 0.0, 128
        %275 = vxpose.xlu0.b32.end [16/16] 0.0, 128
        %v276 = vpop.trf.xlu0
        %v277 = vpop.trf.xlu0
        %v278 = vpop.trf.xlu0
        %v279 = vpop.trf.xlu0
        %v280 = vpop.trf.xlu0
        %v281 = vpop.trf.xlu0
        %v282 = vpop.trf.xlu0
        %v283 = vpop.trf.xlu0
        %v284 = vpop.trf.xlu0
        %v285 = vpop.trf.xlu0
        %v286 = vpop.trf.xlu0
        %v287 = vpop.trf.xlu0
        %v288 = vpop.trf.xlu0
        %v289 = vpop.trf.xlu0
        %v290 = vpop.trf.xlu0
        %v291 = vpop.trf.xlu0
        %292 = vxpose.xlu0.b32.start [1/16] %v243, 128
        %293 = vxpose.xlu0.b32.cont [2/16] 0.0, 128
        %294 = vxpose.xlu0.b32.cont [3/16] 0.0, 128
        %295 = vxpose.xlu0.b32.cont [4/16] 0.0, 128
        %296 = vxpose.xlu0.b32.cont [5/16] 0.0, 128
        %297 = vxpose.xlu0.b32.cont [6/16] 0.0, 128
        %298 = vxpose.xlu0.b32.cont [7/16] 0.0, 128
        %299 = vxpose.xlu0.b32.cont [8/16] 0.0, 128
        %300 = vxpose.xlu0.b32.cont [9/16] 0.0, 128
        %301 = vxpose.xlu0.b32.cont [10/16] 0.0, 128
        %302 = vxpose.xlu0.b32.cont [11/16] 0.0, 128
        %303 = vxpose.xlu0.b32.cont [12/16] 0.0, 128
        %304 = vxpose.xlu0.b32.cont [13/16] 0.0, 128
        %305 = vxpose.xlu0.b32.cont [14/16] 0.0, 128
        %306 = vxpose.xlu0.b32.cont [15/16] 0.0, 128
        %307 = vxpose.xlu0.b32.end [16/16] 0.0, 128
        %v308 = vpop.trf.xlu0
        %v309 = vpop.trf.xlu0
        %v310 = vpop.trf.xlu0
        %v311 = vpop.trf.xlu0
        %v312 = vpop.trf.xlu0
        %v313 = vpop.trf.xlu0
        %v314 = vpop.trf.xlu0
        %v315 = vpop.trf.xlu0
        %v316 = vpop.trf.xlu0
        %v317 = vpop.trf.xlu0
        %v318 = vpop.trf.xlu0
        %v319 = vpop.trf.xlu0
        %v320 = vpop.trf.xlu0
        %v321 = vpop.trf.xlu0
        %v322 = vpop.trf.xlu0
        %v323 = vpop.trf.xlu0
        %324 = vxpose.xlu0.b32.start [1/16] %v244, 128
        %325 = vxpose.xlu0.b32.cont [2/16] 0.0, 128
        %326 = vxpose.xlu0.b32.cont [3/16] 0.0, 128
        %327 = vxpose.xlu0.b32.cont [4/16] 0.0, 128
        %328 = vxpose.xlu0.b32.cont [5/16] 0.0, 128
        %329 = vxpose.xlu0.b32.cont [6/16] 0.0, 128
        %330 = vxpose.xlu0.b32.cont [7/16] 0.0, 128
        %331 = vxpose.xlu0.b32.cont [8/16] 0.0, 128
        %332 = vxpose.xlu0.b32.cont [9/16] 0.0, 128
        %333 = vxpose.xlu0.b32.cont [10/16] 0.0, 128
        %334 = vxpose.xlu0.b32.cont [11/16] 0.0, 128
        %335 = vxpose.xlu0.b32.cont [12/16] 0.0, 128
        %336 = vxpose.xlu0.b32.cont [13/16] 0.0, 128
        %337 = vxpose.xlu0.b32.cont [14/16] 0.0, 128
        %338 = vxpose.xlu0.b32.cont [15/16] 0.0, 128
        %339 = vxpose.xlu0.b32.end [16/16] 0.0, 128
        %v340 = vpop.trf.xlu0
        %v341 = vpop.trf.xlu0
        %v342 = vpop.trf.xlu0
        %v343 = vpop.trf.xlu0
        %v344 = vpop.trf.xlu0
        %v345 = vpop.trf.xlu0
        %v346 = vpop.trf.xlu0
        %v347 = vpop.trf.xlu0
        %v348 = vpop.trf.xlu0
        %v349 = vpop.trf.xlu0
        %v350 = vpop.trf.xlu0
        %v351 = vpop.trf.xlu0
        %v352 = vpop.trf.xlu0
        %v353 = vpop.trf.xlu0
        %v354 = vpop.trf.xlu0
        %v355 = vpop.trf.xlu0
        %356 = vxpose.xlu0.b32.start [1/16] %v245, 128
        %357 = vxpose.xlu0.b32.cont [2/16] 0.0, 128
        %358 = vxpose.xlu0.b32.cont [3/16] 0.0, 128
        %359 = vxpose.xlu0.b32.cont [4/16] 0.0, 128
        %360 = vxpose.xlu0.b32.cont [5/16] 0.0, 128
        %361 = vxpose.xlu0.b32.cont [6/16] 0.0, 128
        %362 = vxpose.xlu0.b32.cont [7/16] 0.0, 128
        %363 = vxpose.xlu0.b32.cont [8/16] 0.0, 128
        %364 = vxpose.xlu0.b32.cont [9/16] 0.0, 128
        %365 = vxpose.xlu0.b32.cont [10/16] 0.0, 128
        %366 = vxpose.xlu0.b32.cont [11/16] 0.0, 128
        %367 = vxpose.xlu0.b32.cont [12/16] 0.0, 128
        %368 = vxpose.xlu0.b32.cont [13/16] 0.0, 128
        %369 = vxpose.xlu0.b32.cont [14/16] 0.0, 128
        %370 = vxpose.xlu0.b32.cont [15/16] 0.0, 128
        %371 = vxpose.xlu0.b32.end [16/16] 0.0, 128
        %v372 = vpop.trf.xlu0
        %v373 = vpop.trf.xlu0
        %v374 = vpop.trf.xlu0
        %v375 = vpop.trf.xlu0
        %v376 = vpop.trf.xlu0
        %v377 = vpop.trf.xlu0
        %v378 = vpop.trf.xlu0
        %v379 = vpop.trf.xlu0
        %v380 = vpop.trf.xlu0
        %v381 = vpop.trf.xlu0
        %v382 = vpop.trf.xlu0
        %v383 = vpop.trf.xlu0
        %v384 = vpop.trf.xlu0
        %v385 = vpop.trf.xlu0
        %v386 = vpop.trf.xlu0
        %v387 = vpop.trf.xlu0
        %388 = vxpose.xlu0.b32.start [1/16] %v246, 128
        %389 = vxpose.xlu0.b32.cont [2/16] 0.0, 128
        %390 = vxpose.xlu0.b32.cont [3/16] 0.0, 128
        %391 = vxpose.xlu0.b32.cont [4/16] 0.0, 128
        %392 = vxpose.xlu0.b32.cont [5/16] 0.0, 128
        %393 = vxpose.xlu0.b32.cont [6/16] 0.0, 128
        %394 = vxpose.xlu0.b32.cont [7/16] 0.0, 128
        %395 = vxpose.xlu0.b32.cont [8/16] 0.0, 128
        %396 = vxpose.xlu0.b32.cont [9/16] 0.0, 128
        %397 = vxpose.xlu0.b32.cont [10/16] 0.0, 128
        %398 = vxpose.xlu0.b32.cont [11/16] 0.0, 128
        %399 = vxpose.xlu0.b32.cont [12/16] 0.0, 128
        %400 = vxpose.xlu0.b32.cont [13/16] 0.0, 128
        %401 = vxpose.xlu0.b32.cont [14/16] 0.0, 128
        %402 = vxpose.xlu0.b32.cont [15/16] 0.0, 128
        %403 = vxpose.xlu0.b32.end [16/16] 0.0, 128
        %v404 = vpop.trf.xlu0
        %v405 = vpop.trf.xlu0
        %v406 = vpop.trf.xlu0
        %v407 = vpop.trf.xlu0
        %v408 = vpop.trf.xlu0
        %v409 = vpop.trf.xlu0
        %v410 = vpop.trf.xlu0
        %v411 = vpop.trf.xlu0
        %v412 = vpop.trf.xlu0
        %v413 = vpop.trf.xlu0
        %v414 = vpop.trf.xlu0
        %v415 = vpop.trf.xlu0
        %v416 = vpop.trf.xlu0
        %v417 = vpop.trf.xlu0
        %v418 = vpop.trf.xlu0
        %v419 = vpop.trf.xlu0
        %420 = vxpose.xlu0.b32.start [1/16] %v247, 128
        %421 = vxpose.xlu0.b32.cont [2/16] 0.0, 128
        %422 = vxpose.xlu0.b32.cont [3/16] 0.0, 128
        %423 = vxpose.xlu0.b32.cont [4/16] 0.0, 128
        %424 = vxpose.xlu0.b32.cont [5/16] 0.0, 128
        %425 = vxpose.xlu0.b32.cont [6/16] 0.0, 128
        %426 = vxpose.xlu0.b32.cont [7/16] 0.0, 128
        %427 = vxpose.xlu0.b32.cont [8/16] 0.0, 128
        %428 = vxpose.xlu0.b32.cont [9/16] 0.0, 128
        %429 = vxpose.xlu0.b32.cont [10/16] 0.0, 128
        %430 = vxpose.xlu0.b32.cont [11/16] 0.0, 128
        %431 = vxpose.xlu0.b32.cont [12/16] 0.0, 128
        %432 = vxpose.xlu0.b32.cont [13/16] 0.0, 128
        %433 = vxpose.xlu0.b32.cont [14/16] 0.0, 128
        %434 = vxpose.xlu0.b32.cont [15/16] 0.0, 128
        %435 = vxpose.xlu0.b32.end [16/16] 0.0, 128
        %v436 = vpop.trf.xlu0
        %v437 = vpop.trf.xlu0
        %v438 = vpop.trf.xlu0
        %v439 = vpop.trf.xlu0
        %v440 = vpop.trf.xlu0
        %v441 = vpop.trf.xlu0
        %v442 = vpop.trf.xlu0
        %v443 = vpop.trf.xlu0
        %v444 = vpop.trf.xlu0
        %v445 = vpop.trf.xlu0
        %v446 = vpop.trf.xlu0
        %v447 = vpop.trf.xlu0
        %v448 = vpop.trf.xlu0
        %v449 = vpop.trf.xlu0
        %v450 = vpop.trf.xlu0
        %v451 = vpop.trf.xlu0
        %452 = vxpose.xlu0.b32.start [1/16] %v248, 128
        %453 = vxpose.xlu0.b32.cont [2/16] 0.0, 128
        %454 = vxpose.xlu0.b32.cont [3/16] 0.0, 128
        %455 = vxpose.xlu0.b32.cont [4/16] 0.0, 128
        %456 = vxpose.xlu0.b32.cont [5/16] 0.0, 128
        %457 = vxpose.xlu0.b32.cont [6/16] 0.0, 128
        %458 = vxpose.xlu0.b32.cont [7/16] 0.0, 128
        %459 = vxpose.xlu0.b32.cont [8/16] 0.0, 128
        %460 = vxpose.xlu0.b32.cont [9/16] 0.0, 128
        %461 = vxpose.xlu0.b32.cont [10/16] 0.0, 128
        %462 = vxpose.xlu0.b32.cont [11/16] 0.0, 128
        %463 = vxpose.xlu0.b32.cont [12/16] 0.0, 128
        %464 = vxpose.xlu0.b32.cont [13/16] 0.0, 128
        %465 = vxpose.xlu0.b32.cont [14/16] 0.0, 128
        %466 = vxpose.xlu0.b32.cont [15/16] 0.0, 128
        %467 = vxpose.xlu0.b32.end [16/16] 0.0, 128
        %v468 = vpop.trf.xlu0
        %v469 = vpop.trf.xlu0
        %v470 = vpop.trf.xlu0
        %v471 = vpop.trf.xlu0
        %v472 = vpop.trf.xlu0
        %v473 = vpop.trf.xlu0
        %v474 = vpop.trf.xlu0
        %v475 = vpop.trf.xlu0
        %v476 = vpop.trf.xlu0
        %v477 = vpop.trf.xlu0
        %v478 = vpop.trf.xlu0
        %v479 = vpop.trf.xlu0
        %v480 = vpop.trf.xlu0
        %v481 = vpop.trf.xlu0
        %v482 = vpop.trf.xlu0
        %v483 = vpop.trf.xlu0
        %484 = vxpose.xlu0.b32.start [1/16] %v249, 128
        %485 = vxpose.xlu0.b32.cont [2/16] 0.0, 128
        %486 = vxpose.xlu0.b32.cont [3/16] 0.0, 128
        %487 = vxpose.xlu0.b32.cont [4/16] 0.0, 128
        %488 = vxpose.xlu0.b32.cont [5/16] 0.0, 128
        %489 = vxpose.xlu0.b32.cont [6/16] 0.0, 128
        %490 = vxpose.xlu0.b32.cont [7/16] 0.0, 128
        %491 = vxpose.xlu0.b32.cont [8/16] 0.0, 128
        %492 = vxpose.xlu0.b32.cont [9/16] 0.0, 128
        %493 = vxpose.xlu0.b32.cont [10/16] 0.0, 128
        %494 = vxpose.xlu0.b32.cont [11/16] 0.0, 128
        %495 = vxpose.xlu0.b32.cont [12/16] 0.0, 128
        %496 = vxpose.xlu0.b32.cont [13/16] 0.0, 128
        %497 = vxpose.xlu0.b32.cont [14/16] 0.0, 128
        %498 = vxpose.xlu0.b32.cont [15/16] 0.0, 128
        %499 = vxpose.xlu0.b32.end [16/16] 0.0, 128
        %v500 = vpop.trf.xlu0
        %v501 = vpop.trf.xlu0
        %v502 = vpop.trf.xlu0
        %v503 = vpop.trf.xlu0
        %v504 = vpop.trf.xlu0
        %v505 = vpop.trf.xlu0
        %v506 = vpop.trf.xlu0
        %v507 = vpop.trf.xlu0
        %v508 = vpop.trf.xlu0
        %v509 = vpop.trf.xlu0
        %v510 = vpop.trf.xlu0
        %v511 = vpop.trf.xlu0
        %v512 = vpop.trf.xlu0
        %v513 = vpop.trf.xlu0
        %v514 = vpop.trf.xlu0
        %v515 = vpop.trf.xlu0
        %516 = vxpose.xlu0.b32.start [1/16] %v250, 128
        %517 = vxpose.xlu0.b32.cont [2/16] 0.0, 128
        %518 = vxpose.xlu0.b32.cont [3/16] 0.0, 128
        %519 = vxpose.xlu0.b32.cont [4/16] 0.0, 128
        %520 = vxpose.xlu0.b32.cont [5/16] 0.0, 128
        %521 = vxpose.xlu0.b32.cont [6/16] 0.0, 128
        %522 = vxpose.xlu0.b32.cont [7/16] 0.0, 128
        %523 = vxpose.xlu0.b32.cont [8/16] 0.0, 128
        %524 = vxpose.xlu0.b32.cont [9/16] 0.0, 128
        %525 = vxpose.xlu0.b32.cont [10/16] 0.0, 128
        %526 = vxpose.xlu0.b32.cont [11/16] 0.0, 128
        %527 = vxpose.xlu0.b32.cont [12/16] 0.0, 128
        %528 = vxpose.xlu0.b32.cont [13/16] 0.0, 128
        %529 = vxpose.xlu0.b32.cont [14/16] 0.0, 128
        %530 = vxpose.xlu0.b32.cont [15/16] 0.0, 128
        %531 = vxpose.xlu0.b32.end [16/16] 0.0, 128
        %v532 = vpop.trf.xlu0
        %v533 = vpop.trf.xlu0
        %v534 = vpop.trf.xlu0
        %v535 = vpop.trf.xlu0
        %v536 = vpop.trf.xlu0
        %v537 = vpop.trf.xlu0
        %v538 = vpop.trf.xlu0
        %v539 = vpop.trf.xlu0
        %v540 = vpop.trf.xlu0
        %v541 = vpop.trf.xlu0
        %v542 = vpop.trf.xlu0
        %v543 = vpop.trf.xlu0
        %v544 = vpop.trf.xlu0
        %v545 = vpop.trf.xlu0
        %v546 = vpop.trf.xlu0
        %v547 = vpop.trf.xlu0
        %548 = vxpose.xlu0.b32.start [1/16] %v251, 128
        %549 = vxpose.xlu0.b32.cont [2/16] 0.0, 128
        %550 = vxpose.xlu0.b32.cont [3/16] 0.0, 128
        %551 = vxpose.xlu0.b32.cont [4/16] 0.0, 128
        %552 = vxpose.xlu0.b32.cont [5/16] 0.0, 128
        %553 = vxpose.xlu0.b32.cont [6/16] 0.0, 128
        %554 = vxpose.xlu0.b32.cont [7/16] 0.0, 128
        %555 = vxpose.xlu0.b32.cont [8/16] 0.0, 128
        %556 = vxpose.xlu0.b32.cont [9/16] 0.0, 128
        %557 = vxpose.xlu0.b32.cont [10/16] 0.0, 128
        %558 = vxpose.xlu0.b32.cont [11/16] 0.0, 128
        %559 = vxpose.xlu0.b32.cont [12/16] 0.0, 128
        %560 = vxpose.xlu0.b32.cont [13/16] 0.0, 128
        %561 = vxpose.xlu0.b32.cont [14/16] 0.0, 128
        %562 = vxpose.xlu0.b32.cont [15/16] 0.0, 128
        %563 = vxpose.xlu0.b32.end [16/16] 0.0, 128
        %v564 = vpop.trf.xlu0
        %v565 = vpop.trf.xlu0
        %v566 = vpop.trf.xlu0
        %v567 = vpop.trf.xlu0
        %v568 = vpop.trf.xlu0
        %v569 = vpop.trf.xlu0
        %v570 = vpop.trf.xlu0
        %v571 = vpop.trf.xlu0
        %v572 = vpop.trf.xlu0
        %v573 = vpop.trf.xlu0
        %v574 = vpop.trf.xlu0
        %v575 = vpop.trf.xlu0
        %v576 = vpop.trf.xlu0
        %v577 = vpop.trf.xlu0
        %v578 = vpop.trf.xlu0
        %v579 = vpop.trf.xlu0
        %580 = vxpose.xlu0.b32.start [1/16] %v252, 128
        %581 = vxpose.xlu0.b32.cont [2/16] 0.0, 128
        %582 = vxpose.xlu0.b32.cont [3/16] 0.0, 128
        %583 = vxpose.xlu0.b32.cont [4/16] 0.0, 128
        %584 = vxpose.xlu0.b32.cont [5/16] 0.0, 128
        %585 = vxpose.xlu0.b32.cont [6/16] 0.0, 128
        %586 = vxpose.xlu0.b32.cont [7/16] 0.0, 128
        %587 = vxpose.xlu0.b32.cont [8/16] 0.0, 128
        %588 = vxpose.xlu0.b32.cont [9/16] 0.0, 128
        %589 = vxpose.xlu0.b32.cont [10/16] 0.0, 128
        %590 = vxpose.xlu0.b32.cont [11/16] 0.0, 128
        %591 = vxpose.xlu0.b32.cont [12/16] 0.0, 128
        %592 = vxpose.xlu0.b32.cont [13/16] 0.0, 128
        %593 = vxpose.xlu0.b32.cont [14/16] 0.0, 128
        %594 = vxpose.xlu0.b32.cont [15/16] 0.0, 128
        %595 = vxpose.xlu0.b32.end [16/16] 0.0, 128
        %v596 = vpop.trf.xlu0
        %v597 = vpop.trf.xlu0
        %v598 = vpop.trf.xlu0
        %v599 = vpop.trf.xlu0
        %v600 = vpop.trf.xlu0
        %v601 = vpop.trf.xlu0
        %v602 = vpop.trf.xlu0
        %v603 = vpop.trf.xlu0
        %v604 = vpop.trf.xlu0
        %v605 = vpop.trf.xlu0
        %v606 = vpop.trf.xlu0
        %v607 = vpop.trf.xlu0
        %v608 = vpop.trf.xlu0
        %v609 = vpop.trf.xlu0
        %v610 = vpop.trf.xlu0
        %v611 = vpop.trf.xlu0
        %612 = vxpose.xlu0.b32.start [1/16] %v253, 128
        %613 = vxpose.xlu0.b32.cont [2/16] 0.0, 128
        %614 = vxpose.xlu0.b32.cont [3/16] 0.0, 128
        %615 = vxpose.xlu0.b32.cont [4/16] 0.0, 128
        %616 = vxpose.xlu0.b32.cont [5/16] 0.0, 128
        %617 = vxpose.xlu0.b32.cont [6/16] 0.0, 128
        %618 = vxpose.xlu0.b32.cont [7/16] 0.0, 128
        %619 = vxpose.xlu0.b32.cont [8/16] 0.0, 128
        %620 = vxpose.xlu0.b32.cont [9/16] 0.0, 128
        %621 = vxpose.xlu0.b32.cont [10/16] 0.0, 128
        %622 = vxpose.xlu0.b32.cont [11/16] 0.0, 128
        %623 = vxpose.xlu0.b32.cont [12/16] 0.0, 128
        %624 = vxpose.xlu0.b32.cont [13/16] 0.0, 128
        %625 = vxpose.xlu0.b32.cont [14/16] 0.0, 128
        %626 = vxpose.xlu0.b32.cont [15/16] 0.0, 128
        %627 = vxpose.xlu0.b32.end [16/16] 0.0, 128
        %v628 = vpop.trf.xlu0
        %v629 = vpop.trf.xlu0
        %v630 = vpop.trf.xlu0
        %v631 = vpop.trf.xlu0
        %v632 = vpop.trf.xlu0
        %v633 = vpop.trf.xlu0
        %v634 = vpop.trf.xlu0
        %v635 = vpop.trf.xlu0
        %v636 = vpop.trf.xlu0
        %v637 = vpop.trf.xlu0
        %v638 = vpop.trf.xlu0
        %v639 = vpop.trf.xlu0
        %v640 = vpop.trf.xlu0
        %v641 = vpop.trf.xlu0
        %v642 = vpop.trf.xlu0
        %v643 = vpop.trf.xlu0
        %644 = vxpose.xlu0.b32.start [1/16] %v254, 128
        %645 = vxpose.xlu0.b32.cont [2/16] 0.0, 128
        %646 = vxpose.xlu0.b32.cont [3/16] 0.0, 128
        %647 = vxpose.xlu0.b32.cont [4/16] 0.0, 128
        %648 = vxpose.xlu0.b32.cont [5/16] 0.0, 128
        %649 = vxpose.xlu0.b32.cont [6/16] 0.0, 128
        %650 = vxpose.xlu0.b32.cont [7/16] 0.0, 128
        %651 = vxpose.xlu0.b32.cont [8/16] 0.0, 128
        %652 = vxpose.xlu0.b32.cont [9/16] 0.0, 128
        %653 = vxpose.xlu0.b32.cont [10/16] 0.0, 128
        %654 = vxpose.xlu0.b32.cont [11/16] 0.0, 128
        %655 = vxpose.xlu0.b32.cont [12/16] 0.0, 128
        %656 = vxpose.xlu0.b32.cont [13/16] 0.0, 128
        %657 = vxpose.xlu0.b32.cont [14/16] 0.0, 128
        %658 = vxpose.xlu0.b32.cont [15/16] 0.0, 128
        %659 = vxpose.xlu0.b32.end [16/16] 0.0, 128
        %v660 = vpop.trf.xlu0
        %v661 = vpop.trf.xlu0
        %v662 = vpop.trf.xlu0
        %v663 = vpop.trf.xlu0
        %v664 = vpop.trf.xlu0
        %v665 = vpop.trf.xlu0
        %v666 = vpop.trf.xlu0
        %v667 = vpop.trf.xlu0
        %v668 = vpop.trf.xlu0
        %v669 = vpop.trf.xlu0
        %v670 = vpop.trf.xlu0
        %v671 = vpop.trf.xlu0
        %v672 = vpop.trf.xlu0
        %v673 = vpop.trf.xlu0
        %v674 = vpop.trf.xlu0
        %v675 = vpop.trf.xlu0
        %676 = vxpose.xlu0.b32.start [1/16] %v255, 128
        %677 = vxpose.xlu0.b32.cont [2/16] 0.0, 128
        %678 = vxpose.xlu0.b32.cont [3/16] 0.0, 128
        %679 = vxpose.xlu0.b32.cont [4/16] 0.0, 128
        %680 = vxpose.xlu0.b32.cont [5/16] 0.0, 128
        %681 = vxpose.xlu0.b32.cont [6/16] 0.0, 128
        %682 = vxpose.xlu0.b32.cont [7/16] 0.0, 128
        %683 = vxpose.xlu0.b32.cont [8/16] 0.0, 128
        %684 = vxpose.xlu0.b32.cont [9/16] 0.0, 128
        %685 = vxpose.xlu0.b32.cont [10/16] 0.0, 128
        %686 = vxpose.xlu0.b32.cont [11/16] 0.0, 128
        %687 = vxpose.xlu0.b32.cont [12/16] 0.0, 128
        %688 = vxpose.xlu0.b32.cont [13/16] 0.0, 128
        %689 = vxpose.xlu0.b32.cont [14/16] 0.0, 128
        %690 = vxpose.xlu0.b32.cont [15/16] 0.0, 128
        %691 = vxpose.xlu0.b32.end [16/16] 0.0, 128
        %v692 = vpop.trf.xlu0
        %v693 = vpop.trf.xlu0
        %v694 = vpop.trf.xlu0
        %v695 = vpop.trf.xlu0
        %v696 = vpop.trf.xlu0
        %v697 = vpop.trf.xlu0
        %v698 = vpop.trf.xlu0
        %v699 = vpop.trf.xlu0
        %v700 = vpop.trf.xlu0
        %v701 = vpop.trf.xlu0
        %v702 = vpop.trf.xlu0
        %v703 = vpop.trf.xlu0
        %v704 = vpop.trf.xlu0
        %v705 = vpop.trf.xlu0
        %v706 = vpop.trf.xlu0
        %v707 = vpop.trf.xlu0
        %708 = vxpose.xlu0.b32.start [1/16] %v256, 128
        %709 = vxpose.xlu0.b32.cont [2/16] 0.0, 128
        %710 = vxpose.xlu0.b32.cont [3/16] 0.0, 128
        %711 = vxpose.xlu0.b32.cont [4/16] 0.0, 128
        %712 = vxpose.xlu0.b32.cont [5/16] 0.0, 128
        %713 = vxpose.xlu0.b32.cont [6/16] 0.0, 128
        %714 = vxpose.xlu0.b32.cont [7/16] 0.0, 128
        %715 = vxpose.xlu0.b32.cont [8/16] 0.0, 128
        %716 = vxpose.xlu0.b32.cont [9/16] 0.0, 128
        %717 = vxpose.xlu0.b32.cont [10/16] 0.0, 128
        %718 = vxpose.xlu0.b32.cont [11/16] 0.0, 128
        %719 = vxpose.xlu0.b32.cont [12/16] 0.0, 128
        %720 = vxpose.xlu0.b32.cont [13/16] 0.0, 128
        %721 = vxpose.xlu0.b32.cont [14/16] 0.0, 128
        %722 = vxpose.xlu0.b32.cont [15/16] 0.0, 128
        %723 = vxpose.xlu0.b32.end [16/16] 0.0, 128
        %v724 = vpop.trf.xlu0
        %v725 = vpop.trf.xlu0
        %v726 = vpop.trf.xlu0
        %v727 = vpop.trf.xlu0
        %v728 = vpop.trf.xlu0
        %v729 = vpop.trf.xlu0
        %v730 = vpop.trf.xlu0
        %v731 = vpop.trf.xlu0
        %v732 = vpop.trf.xlu0
        %v733 = vpop.trf.xlu0
        %v734 = vpop.trf.xlu0
        %v735 = vpop.trf.xlu0
        %v736 = vpop.trf.xlu0
        %v737 = vpop.trf.xlu0
        %v738 = vpop.trf.xlu0
        %v739 = vpop.trf.xlu0
        %740 = vxpose.xlu0.b32.start [1/16] %v257, 128
        %741 = vxpose.xlu0.b32.cont [2/16] 0.0, 128
        %742 = vxpose.xlu0.b32.cont [3/16] 0.0, 128
        %743 = vxpose.xlu0.b32.cont [4/16] 0.0, 128
        %744 = vxpose.xlu0.b32.cont [5/16] 0.0, 128
        %745 = vxpose.xlu0.b32.cont [6/16] 0.0, 128
        %746 = vxpose.xlu0.b32.cont [7/16] 0.0, 128
        %747 = vxpose.xlu0.b32.cont [8/16] 0.0, 128
        %748 = vxpose.xlu0.b32.cont [9/16] 0.0, 128
        %749 = vxpose.xlu0.b32.cont [10/16] 0.0, 128
        %750 = vxpose.xlu0.b32.cont [11/16] 0.0, 128
        %751 = vxpose.xlu0.b32.cont [12/16] 0.0, 128
        %752 = vxpose.xlu0.b32.cont [13/16] 0.0, 128
        %753 = vxpose.xlu0.b32.cont [14/16] 0.0, 128
        %754 = vxpose.xlu0.b32.cont [15/16] 0.0, 128
        %755 = vxpose.xlu0.b32.end [16/16] 0.0, 128
        %v756 = vpop.trf.xlu0
        %v757 = vpop.trf.xlu0
        %v758 = vpop.trf.xlu0
        %v759 = vpop.trf.xlu0
        %v760 = vpop.trf.xlu0
        %v761 = vpop.trf.xlu0
        %v762 = vpop.trf.xlu0
        %v763 = vpop.trf.xlu0
        %v764 = vpop.trf.xlu0
        %v765 = vpop.trf.xlu0
        %v766 = vpop.trf.xlu0
        %v767 = vpop.trf.xlu0
        %v768 = vpop.trf.xlu0
        %v769 = vpop.trf.xlu0
        %v770 = vpop.trf.xlu0
        %v771 = vpop.trf.xlu0
        %788 = vst [vmem:[#allocation1] ss:$2 sm:$0xff] %v276
        %s789 = scalar_lea.vmem [#allocation1], 1
        %790 = vst [vmem:[%s789] ss:$2 sm:$0xff] %v308
        %s791 = scalar_lea.vmem [#allocation1], 16
        %792 = vst [vmem:[%s791] ss:$2 sm:$0xff] %v340
        %s793 = scalar_lea.vmem [#allocation1], 17
        %794 = vst [vmem:[%s793] ss:$2 sm:$0xff] %v372
        %s795 = scalar_lea.vmem [#allocation1], 32
        %796 = vst [vmem:[%s795] ss:$2 sm:$0xff] %v404
        %s797 = scalar_lea.vmem [#allocation1], 33
        %798 = vst [vmem:[%s797] ss:$2 sm:$0xff] %v436
        %s799 = scalar_lea.vmem [#allocation1], 48
        %800 = vst [vmem:[%s799] ss:$2 sm:$0xff] %v468
        %s801 = scalar_lea.vmem [#allocation1], 49
        %802 = vst [vmem:[%s801] ss:$2 sm:$0xff] %v500
        %v803 = vld.sshfl [vmem:[#allocation1] sm:$0xff pattern:$0x75316420]
        %v804 = vld.sshfl [vmem:[#allocation1 + $0x10] sm:$0xff pattern:$0x75316420]
        %v805 = vld.sshfl [vmem:[#allocation1 + $0x20] sm:$0xff pattern:$0x75316420]
        %v806 = vld.sshfl [vmem:[#allocation1 + $0x30] sm:$0xff pattern:$0x75316420]
        %807 = vst [vmem:[#allocation1] ss:$2 sm:$0xff] %v532
        %808 = vst [vmem:[%s789] ss:$2 sm:$0xff] %v564
        %809 = vst [vmem:[%s791] ss:$2 sm:$0xff] %v596
        %810 = vst [vmem:[%s793] ss:$2 sm:$0xff] %v628
        %811 = vst [vmem:[%s795] ss:$2 sm:$0xff] %v660
        %812 = vst [vmem:[%s797] ss:$2 sm:$0xff] %v692
        %813 = vst [vmem:[%s799] ss:$2 sm:$0xff] %v724
        %814 = vst [vmem:[%s801] ss:$2 sm:$0xff] %v756
        %v815 = vld.sshfl [vmem:[#allocation1] sm:$0xff pattern:$0x75316420]
        %v816 = vld.sshfl [vmem:[#allocation1 + $0x10] sm:$0xff pattern:$0x75316420]
        %v817 = vld.sshfl [vmem:[#allocation1 + $0x20] sm:$0xff pattern:$0x75316420]
        %v818 = vld.sshfl [vmem:[#allocation1 + $0x30] sm:$0xff pattern:$0x75316420]
        %vm819 = vcmask 31744
        %v820 = vsel %vm819, %v803, 0
        %v822 = vsel %vm819, %v804, 0
        %v824 = vsel %vm819, %v805, 0
        %v826 = vsel %vm819, %v806, 0
        %v828 = vsel %vm819, %v815, 0
        %v830 = vsel %vm819, %v816, 0
        %v832 = vsel %vm819, %v817, 0
        %v834 = vsel %vm819, %v818, 0
        %vm836 = vcmask 1043456
        %v838 = vsel %vm836, %v258, 0
        %840 = vmatpush.msra.mxu0 0.0
        %841 = vmatpush.msra.mxu0 0.0
        %842 = vmatpush.msra.mxu0 0.0
        %843 = vmatpush.msra.mxu0 0.0
        %844 = vmatpush.msra.mxu0 0.0
        %845 = vmatpush.msra.mxu0 0.0
        %846 = vmatpush.msra.mxu0 0.0
        %847 = vmatpush.msra.mxu0 0.0
        %848 = vmatpush.msra.mxu0 0.0
        %849 = vmatpush.msra.mxu0 0.0
        %850 = vmatpush.msra.mxu0 0.0
        %851 = vmatpush.msra.mxu0 0.0
        %852 = vmatpush.msra.mxu0 0.0
        %853 = vmatpush.msra.mxu0 0.0
        %854 = vmatpush.msra.mxu0 0.0
        %855 = vmatpush.msra.mxu0 %v838
        %856 = vmatmul.f32.gmra.mxu0 %v820
        %v857 = vpop.f32.mrf.mxu0
        %v858 = vadd.f32 0.0, %v857
        %859 = vmatmul.f32.gmra.mxu0 %v822
        %v860 = vpop.f32.mrf.mxu0
        %v861 = vadd.f32 0.0, %v860
        %862 = vmatmul.f32.gmra.mxu0 %v824
        %v863 = vpop.f32.mrf.mxu0
        %v864 = vadd.f32 0.0, %v863
        %865 = vmatmul.f32.gmra.mxu0 %v826
        %v866 = vpop.f32.mrf.mxu0
        %v867 = vadd.f32 0.0, %v866
        %868 = vmatmul.f32.gmra.mxu0 %v828
        %v869 = vpop.f32.mrf.mxu0
        %v870 = vadd.f32 0.0, %v869
        %871 = vmatmul.f32.gmra.mxu0 %v830
        %v872 = vpop.f32.mrf.mxu0
        %v873 = vadd.f32 0.0, %v872
        %874 = vmatmul.f32.gmra.mxu0 %v832
        %v875 = vpop.f32.mrf.mxu0
        %v876 = vadd.f32 0.0, %v875
        %877 = vmatmul.f32.gmra.mxu0 %v834
        %v878 = vpop.f32.mrf.mxu0
        %v879 = vadd.f32 0.0, %v878
        %880 = vdwg.mxu0
        %v889 = vrot.slane %v858, 4
        %v890 = vrot.slane %v861, 4
        %v891 = vrot.slane %v864, 4
        %v892 = vrot.slane %v867, 4
        %v893 = vrot.slane %v870, 4
        %v894 = vrot.slane %v873, 4
        %v895 = vrot.slane %v876, 4
        %v896 = vrot.slane %v879, 4
        %905 = vxpose.xlu0.b32.start [1/16] %v858, 128
        %906 = vxpose.xlu0.b32.cont [2/16] 0.0, 128
        %907 = vxpose.xlu0.b32.cont [3/16] 0.0, 128
        %908 = vxpose.xlu0.b32.cont [4/16] 0.0, 128
        %909 = vxpose.xlu0.b32.cont [5/16] 0.0, 128
        %910 = vxpose.xlu0.b32.cont [6/16] 0.0, 128
        %911 = vxpose.xlu0.b32.cont [7/16] 0.0, 128
        %912 = vxpose.xlu0.b32.cont [8/16] 0.0, 128
        %913 = vxpose.xlu0.b32.cont [9/16] 0.0, 128
        %914 = vxpose.xlu0.b32.cont [10/16] 0.0, 128
        %915 = vxpose.xlu0.b32.cont [11/16] 0.0, 128
        %916 = vxpose.xlu0.b32.cont [12/16] 0.0, 128
        %917 = vxpose.xlu0.b32.cont [13/16] 0.0, 128
        %918 = vxpose.xlu0.b32.cont [14/16] 0.0, 128
        %919 = vxpose.xlu0.b32.cont [15/16] 0.0, 128
        %920 = vxpose.xlu0.b32.end [16/16] 0.0, 128
        %v921 = vpop.trf.xlu0
        %v922 = vpop.trf.xlu0
        %v923 = vpop.trf.xlu0
        %v924 = vpop.trf.xlu0
        %v925 = vpop.trf.xlu0
        %v926 = vpop.trf.xlu0
        %v927 = vpop.trf.xlu0
        %v928 = vpop.trf.xlu0
        %v929 = vpop.trf.xlu0
        %v930 = vpop.trf.xlu0
        %v931 = vpop.trf.xlu0
        %v932 = vpop.trf.xlu0
        %v933 = vpop.trf.xlu0
        %v934 = vpop.trf.xlu0
        %v935 = vpop.trf.xlu0
        %v936 = vpop.trf.xlu0
        %937 = vxpose.xlu0.b32.start [1/16] %v889, 128
        %938 = vxpose.xlu0.b32.cont [2/16] 0.0, 128
        %939 = vxpose.xlu0.b32.cont [3/16] 0.0, 128
        %940 = vxpose.xlu0.b32.cont [4/16] 0.0, 128
        %941 = vxpose.xlu0.b32.cont [5/16] 0.0, 128
        %942 = vxpose.xlu0.b32.cont [6/16] 0.0, 128
        %943 = vxpose.xlu0.b32.cont [7/16] 0.0, 128
        %944 = vxpose.xlu0.b32.cont [8/16] 0.0, 128
        %945 = vxpose.xlu0.b32.cont [9/16] 0.0, 128
        %946 = vxpose.xlu0.b32.cont [10/16] 0.0, 128
        %947 = vxpose.xlu0.b32.cont [11/16] 0.0, 128
        %948 = vxpose.xlu0.b32.cont [12/16] 0.0, 128
        %949 = vxpose.xlu0.b32.cont [13/16] 0.0, 128
        %950 = vxpose.xlu0.b32.cont [14/16] 0.0, 128
        %951 = vxpose.xlu0.b32.cont [15/16] 0.0, 128
        %952 = vxpose.xlu0.b32.end [16/16] 0.0, 128
        %v953 = vpop.trf.xlu0
        %v954 = vpop.trf.xlu0
        %v955 = vpop.trf.xlu0
        %v956 = vpop.trf.xlu0
        %v957 = vpop.trf.xlu0
        %v958 = vpop.trf.xlu0
        %v959 = vpop.trf.xlu0
        %v960 = vpop.trf.xlu0
        %v961 = vpop.trf.xlu0
        %v962 = vpop.trf.xlu0
        %v963 = vpop.trf.xlu0
        %v964 = vpop.trf.xlu0
        %v965 = vpop.trf.xlu0
        %v966 = vpop.trf.xlu0
        %v967 = vpop.trf.xlu0
        %v968 = vpop.trf.xlu0
        %969 = vxpose.xlu0.b32.start [1/16] %v861, 128
        %970 = vxpose.xlu0.b32.cont [2/16] 0.0, 128
        %971 = vxpose.xlu0.b32.cont [3/16] 0.0, 128
        %972 = vxpose.xlu0.b32.cont [4/16] 0.0, 128
        %973 = vxpose.xlu0.b32.cont [5/16] 0.0, 128
        %974 = vxpose.xlu0.b32.cont [6/16] 0.0, 128
        %975 = vxpose.xlu0.b32.cont [7/16] 0.0, 128
        %976 = vxpose.xlu0.b32.cont [8/16] 0.0, 128
        %977 = vxpose.xlu0.b32.cont [9/16] 0.0, 128
        %978 = vxpose.xlu0.b32.cont [10/16] 0.0, 128
        %979 = vxpose.xlu0.b32.cont [11/16] 0.0, 128
        %980 = vxpose.xlu0.b32.cont [12/16] 0.0, 128
        %981 = vxpose.xlu0.b32.cont [13/16] 0.0, 128
        %982 = vxpose.xlu0.b32.cont [14/16] 0.0, 128
        %983 = vxpose.xlu0.b32.cont [15/16] 0.0, 128
        %984 = vxpose.xlu0.b32.end [16/16] 0.0, 128
        %v985 = vpop.trf.xlu0
        %v986 = vpop.trf.xlu0
        %v987 = vpop.trf.xlu0
        %v988 = vpop.trf.xlu0
        %v989 = vpop.trf.xlu0
        %v990 = vpop.trf.xlu0
        %v991 = vpop.trf.xlu0
        %v992 = vpop.trf.xlu0
        %v993 = vpop.trf.xlu0
        %v994 = vpop.trf.xlu0
        %v995 = vpop.trf.xlu0
        %v996 = vpop.trf.xlu0
        %v997 = vpop.trf.xlu0
        %v998 = vpop.trf.xlu0
        %v999 = vpop.trf.xlu0
        %v1000 = vpop.trf.xlu0
        %1001 = vxpose.xlu0.b32.start [1/16] %v890, 128
        %1002 = vxpose.xlu0.b32.cont [2/16] 0.0, 128
        %1003 = vxpose.xlu0.b32.cont [3/16] 0.0, 128
        %1004 = vxpose.xlu0.b32.cont [4/16] 0.0, 128
        %1005 = vxpose.xlu0.b32.cont [5/16] 0.0, 128
        %1006 = vxpose.xlu0.b32.cont [6/16] 0.0, 128
        %1007 = vxpose.xlu0.b32.cont [7/16] 0.0, 128
        %1008 = vxpose.xlu0.b32.cont [8/16] 0.0, 128
        %1009 = vxpose.xlu0.b32.cont [9/16] 0.0, 128
        %1010 = vxpose.xlu0.b32.cont [10/16] 0.0, 128
        %1011 = vxpose.xlu0.b32.cont [11/16] 0.0, 128
        %1012 = vxpose.xlu0.b32.cont [12/16] 0.0, 128
        %1013 = vxpose.xlu0.b32.cont [13/16] 0.0, 128
        %1014 = vxpose.xlu0.b32.cont [14/16] 0.0, 128
        %1015 = vxpose.xlu0.b32.cont [15/16] 0.0, 128
        %1016 = vxpose.xlu0.b32.end [16/16] 0.0, 128
        %v1017 = vpop.trf.xlu0
        %v1018 = vpop.trf.xlu0
        %v1019 = vpop.trf.xlu0
        %v1020 = vpop.trf.xlu0
        %v1021 = vpop.trf.xlu0
        %v1022 = vpop.trf.xlu0
        %v1023 = vpop.trf.xlu0
        %v1024 = vpop.trf.xlu0
        %v1025 = vpop.trf.xlu0
        %v1026 = vpop.trf.xlu0
        %v1027 = vpop.trf.xlu0
        %v1028 = vpop.trf.xlu0
        %v1029 = vpop.trf.xlu0
        %v1030 = vpop.trf.xlu0
        %v1031 = vpop.trf.xlu0
        %v1032 = vpop.trf.xlu0
        %1033 = vxpose.xlu0.b32.start [1/16] %v864, 128
        %1034 = vxpose.xlu0.b32.cont [2/16] 0.0, 128
        %1035 = vxpose.xlu0.b32.cont [3/16] 0.0, 128
        %1036 = vxpose.xlu0.b32.cont [4/16] 0.0, 128
        %1037 = vxpose.xlu0.b32.cont [5/16] 0.0, 128
        %1038 = vxpose.xlu0.b32.cont [6/16] 0.0, 128
        %1039 = vxpose.xlu0.b32.cont [7/16] 0.0, 128
        %1040 = vxpose.xlu0.b32.cont [8/16] 0.0, 128
        %1041 = vxpose.xlu0.b32.cont [9/16] 0.0, 128
        %1042 = vxpose.xlu0.b32.cont [10/16] 0.0, 128
        %1043 = vxpose.xlu0.b32.cont [11/16] 0.0, 128
        %1044 = vxpose.xlu0.b32.cont [12/16] 0.0, 128
        %1045 = vxpose.xlu0.b32.cont [13/16] 0.0, 128
        %1046 = vxpose.xlu0.b32.cont [14/16] 0.0, 128
        %1047 = vxpose.xlu0.b32.cont [15/16] 0.0, 128
        %1048 = vxpose.xlu0.b32.end [16/16] 0.0, 128
        %v1049 = vpop.trf.xlu0
        %v1050 = vpop.trf.xlu0
        %v1051 = vpop.trf.xlu0
        %v1052 = vpop.trf.xlu0
        %v1053 = vpop.trf.xlu0
        %v1054 = vpop.trf.xlu0
        %v1055 = vpop.trf.xlu0
        %v1056 = vpop.trf.xlu0
        %v1057 = vpop.trf.xlu0
        %v1058 = vpop.trf.xlu0
        %v1059 = vpop.trf.xlu0
        %v1060 = vpop.trf.xlu0
        %v1061 = vpop.trf.xlu0
        %v1062 = vpop.trf.xlu0
        %v1063 = vpop.trf.xlu0
        %v1064 = vpop.trf.xlu0
        %1065 = vxpose.xlu0.b32.start [1/16] %v891, 128
        %1066 = vxpose.xlu0.b32.cont [2/16] 0.0, 128
        %1067 = vxpose.xlu0.b32.cont [3/16] 0.0, 128
        %1068 = vxpose.xlu0.b32.cont [4/16] 0.0, 128
        %1069 = vxpose.xlu0.b32.cont [5/16] 0.0, 128
        %1070 = vxpose.xlu0.b32.cont [6/16] 0.0, 128
        %1071 = vxpose.xlu0.b32.cont [7/16] 0.0, 128
        %1072 = vxpose.xlu0.b32.cont [8/16] 0.0, 128
        %1073 = vxpose.xlu0.b32.cont [9/16] 0.0, 128
        %1074 = vxpose.xlu0.b32.cont [10/16] 0.0, 128
        %1075 = vxpose.xlu0.b32.cont [11/16] 0.0, 128
        %1076 = vxpose.xlu0.b32.cont [12/16] 0.0, 128
        %1077 = vxpose.xlu0.b32.cont [13/16] 0.0, 128
        %1078 = vxpose.xlu0.b32.cont [14/16] 0.0, 128
        %1079 = vxpose.xlu0.b32.cont [15/16] 0.0, 128
        %1080 = vxpose.xlu0.b32.end [16/16] 0.0, 128
        %v1081 = vpop.trf.xlu0
        %v1082 = vpop.trf.xlu0
        %v1083 = vpop.trf.xlu0
        %v1084 = vpop.trf.xlu0
        %v1085 = vpop.trf.xlu0
        %v1086 = vpop.trf.xlu0
        %v1087 = vpop.trf.xlu0
        %v1088 = vpop.trf.xlu0
        %v1089 = vpop.trf.xlu0
        %v1090 = vpop.trf.xlu0
        %v1091 = vpop.trf.xlu0
        %v1092 = vpop.trf.xlu0
        %v1093 = vpop.trf.xlu0
        %v1094 = vpop.trf.xlu0
        %v1095 = vpop.trf.xlu0
        %v1096 = vpop.trf.xlu0
        %1097 = vxpose.xlu0.b32.start [1/16] %v867, 128
        %1098 = vxpose.xlu0.b32.cont [2/16] 0.0, 128
        %1099 = vxpose.xlu0.b32.cont [3/16] 0.0, 128
        %1100 = vxpose.xlu0.b32.cont [4/16] 0.0, 128
        %1101 = vxpose.xlu0.b32.cont [5/16] 0.0, 128
        %1102 = vxpose.xlu0.b32.cont [6/16] 0.0, 128
        %1103 = vxpose.xlu0.b32.cont [7/16] 0.0, 128
        %1104 = vxpose.xlu0.b32.cont [8/16] 0.0, 128
        %1105 = vxpose.xlu0.b32.cont [9/16] 0.0, 128
        %1106 = vxpose.xlu0.b32.cont [10/16] 0.0, 128
        %1107 = vxpose.xlu0.b32.cont [11/16] 0.0, 128
        %1108 = vxpose.xlu0.b32.cont [12/16] 0.0, 128
        %1109 = vxpose.xlu0.b32.cont [13/16] 0.0, 128
        %1110 = vxpose.xlu0.b32.cont [14/16] 0.0, 128
        %1111 = vxpose.xlu0.b32.cont [15/16] 0.0, 128
        %1112 = vxpose.xlu0.b32.end [16/16] 0.0, 128
        %v1113 = vpop.trf.xlu0
        %v1114 = vpop.trf.xlu0
        %v1115 = vpop.trf.xlu0
        %v1116 = vpop.trf.xlu0
        %v1117 = vpop.trf.xlu0
        %v1118 = vpop.trf.xlu0
        %v1119 = vpop.trf.xlu0
        %v1120 = vpop.trf.xlu0
        %v1121 = vpop.trf.xlu0
        %v1122 = vpop.trf.xlu0
        %v1123 = vpop.trf.xlu0
        %v1124 = vpop.trf.xlu0
        %v1125 = vpop.trf.xlu0
        %v1126 = vpop.trf.xlu0
        %v1127 = vpop.trf.xlu0
        %v1128 = vpop.trf.xlu0
        %1129 = vxpose.xlu0.b32.start [1/16] %v892, 128
        %1130 = vxpose.xlu0.b32.cont [2/16] 0.0, 128
        %1131 = vxpose.xlu0.b32.cont [3/16] 0.0, 128
        %1132 = vxpose.xlu0.b32.cont [4/16] 0.0, 128
        %1133 = vxpose.xlu0.b32.cont [5/16] 0.0, 128
        %1134 = vxpose.xlu0.b32.cont [6/16] 0.0, 128
        %1135 = vxpose.xlu0.b32.cont [7/16] 0.0, 128
        %1136 = vxpose.xlu0.b32.cont [8/16] 0.0, 128
        %1137 = vxpose.xlu0.b32.cont [9/16] 0.0, 128
        %1138 = vxpose.xlu0.b32.cont [10/16] 0.0, 128
        %1139 = vxpose.xlu0.b32.cont [11/16] 0.0, 128
        %1140 = vxpose.xlu0.b32.cont [12/16] 0.0, 128
        %1141 = vxpose.xlu0.b32.cont [13/16] 0.0, 128
        %1142 = vxpose.xlu0.b32.cont [14/16] 0.0, 128
        %1143 = vxpose.xlu0.b32.cont [15/16] 0.0, 128
        %1144 = vxpose.xlu0.b32.end [16/16] 0.0, 128
        %v1145 = vpop.trf.xlu0
        %v1146 = vpop.trf.xlu0
        %v1147 = vpop.trf.xlu0
        %v1148 = vpop.trf.xlu0
        %v1149 = vpop.trf.xlu0
        %v1150 = vpop.trf.xlu0
        %v1151 = vpop.trf.xlu0
        %v1152 = vpop.trf.xlu0
        %v1153 = vpop.trf.xlu0
        %v1154 = vpop.trf.xlu0
        %v1155 = vpop.trf.xlu0
        %v1156 = vpop.trf.xlu0
        %v1157 = vpop.trf.xlu0
        %v1158 = vpop.trf.xlu0
        %v1159 = vpop.trf.xlu0
        %v1160 = vpop.trf.xlu0
        %1161 = vxpose.xlu0.b32.start [1/16] %v870, 128
        %1162 = vxpose.xlu0.b32.cont [2/16] 0.0, 128
        %1163 = vxpose.xlu0.b32.cont [3/16] 0.0, 128
        %1164 = vxpose.xlu0.b32.cont [4/16] 0.0, 128
        %1165 = vxpose.xlu0.b32.cont [5/16] 0.0, 128
        %1166 = vxpose.xlu0.b32.cont [6/16] 0.0, 128
        %1167 = vxpose.xlu0.b32.cont [7/16] 0.0, 128
        %1168 = vxpose.xlu0.b32.cont [8/16] 0.0, 128
        %1169 = vxpose.xlu0.b32.cont [9/16] 0.0, 128
        %1170 = vxpose.xlu0.b32.cont [10/16] 0.0, 128
        %1171 = vxpose.xlu0.b32.cont [11/16] 0.0, 128
        %1172 = vxpose.xlu0.b32.cont [12/16] 0.0, 128
        %1173 = vxpose.xlu0.b32.cont [13/16] 0.0, 128
        %1174 = vxpose.xlu0.b32.cont [14/16] 0.0, 128
        %1175 = vxpose.xlu0.b32.cont [15/16] 0.0, 128
        %1176 = vxpose.xlu0.b32.end [16/16] 0.0, 128
        %v1177 = vpop.trf.xlu0
        %v1178 = vpop.trf.xlu0
        %v1179 = vpop.trf.xlu0
        %v1180 = vpop.trf.xlu0
        %v1181 = vpop.trf.xlu0
        %v1182 = vpop.trf.xlu0
        %v1183 = vpop.trf.xlu0
        %v1184 = vpop.trf.xlu0
        %v1185 = vpop.trf.xlu0
        %v1186 = vpop.trf.xlu0
        %v1187 = vpop.trf.xlu0
        %v1188 = vpop.trf.xlu0
        %v1189 = vpop.trf.xlu0
        %v1190 = vpop.trf.xlu0
        %v1191 = vpop.trf.xlu0
        %v1192 = vpop.trf.xlu0
        %1193 = vxpose.xlu0.b32.start [1/16] %v893, 128
        %1194 = vxpose.xlu0.b32.cont [2/16] 0.0, 128
        %1195 = vxpose.xlu0.b32.cont [3/16] 0.0, 128
        %1196 = vxpose.xlu0.b32.cont [4/16] 0.0, 128
        %1197 = vxpose.xlu0.b32.cont [5/16] 0.0, 128
        %1198 = vxpose.xlu0.b32.cont [6/16] 0.0, 128
        %1199 = vxpose.xlu0.b32.cont [7/16] 0.0, 128
        %1200 = vxpose.xlu0.b32.cont [8/16] 0.0, 128
        %1201 = vxpose.xlu0.b32.cont [9/16] 0.0, 128
        %1202 = vxpose.xlu0.b32.cont [10/16] 0.0, 128
        %1203 = vxpose.xlu0.b32.cont [11/16] 0.0, 128
        %1204 = vxpose.xlu0.b32.cont [12/16] 0.0, 128
        %1205 = vxpose.xlu0.b32.cont [13/16] 0.0, 128
        %1206 = vxpose.xlu0.b32.cont [14/16] 0.0, 128
        %1207 = vxpose.xlu0.b32.cont [15/16] 0.0, 128
        %1208 = vxpose.xlu0.b32.end [16/16] 0.0, 128
        %v1209 = vpop.trf.xlu0
        %v1210 = vpop.trf.xlu0
        %v1211 = vpop.trf.xlu0
        %v1212 = vpop.trf.xlu0
        %v1213 = vpop.trf.xlu0
        %v1214 = vpop.trf.xlu0
        %v1215 = vpop.trf.xlu0
        %v1216 = vpop.trf.xlu0
        %v1217 = vpop.trf.xlu0
        %v1218 = vpop.trf.xlu0
        %v1219 = vpop.trf.xlu0
        %v1220 = vpop.trf.xlu0
        %v1221 = vpop.trf.xlu0
        %v1222 = vpop.trf.xlu0
        %v1223 = vpop.trf.xlu0
        %v1224 = vpop.trf.xlu0
        %1225 = vxpose.xlu0.b32.start [1/16] %v873, 128
        %1226 = vxpose.xlu0.b32.cont [2/16] 0.0, 128
        %1227 = vxpose.xlu0.b32.cont [3/16] 0.0, 128
        %1228 = vxpose.xlu0.b32.cont [4/16] 0.0, 128
        %1229 = vxpose.xlu0.b32.cont [5/16] 0.0, 128
        %1230 = vxpose.xlu0.b32.cont [6/16] 0.0, 128
        %1231 = vxpose.xlu0.b32.cont [7/16] 0.0, 128
        %1232 = vxpose.xlu0.b32.cont [8/16] 0.0, 128
        %1233 = vxpose.xlu0.b32.cont [9/16] 0.0, 128
        %1234 = vxpose.xlu0.b32.cont [10/16] 0.0, 128
        %1235 = vxpose.xlu0.b32.cont [11/16] 0.0, 128
        %1236 = vxpose.xlu0.b32.cont [12/16] 0.0, 128
        %1237 = vxpose.xlu0.b32.cont [13/16] 0.0, 128
        %1238 = vxpose.xlu0.b32.cont [14/16] 0.0, 128
        %1239 = vxpose.xlu0.b32.cont [15/16] 0.0, 128
        %1240 = vxpose.xlu0.b32.end [16/16] 0.0, 128
        %v1241 = vpop.trf.xlu0
        %v1242 = vpop.trf.xlu0
        %v1243 = vpop.trf.xlu0
        %v1244 = vpop.trf.xlu0
        %v1245 = vpop.trf.xlu0
        %v1246 = vpop.trf.xlu0
        %v1247 = vpop.trf.xlu0
        %v1248 = vpop.trf.xlu0
        %v1249 = vpop.trf.xlu0
        %v1250 = vpop.trf.xlu0
        %v1251 = vpop.trf.xlu0
        %v1252 = vpop.trf.xlu0
        %v1253 = vpop.trf.xlu0
        %v1254 = vpop.trf.xlu0
        %v1255 = vpop.trf.xlu0
        %v1256 = vpop.trf.xlu0
        %1257 = vxpose.xlu0.b32.start [1/16] %v894, 128
        %1258 = vxpose.xlu0.b32.cont [2/16] 0.0, 128
        %1259 = vxpose.xlu0.b32.cont [3/16] 0.0, 128
        %1260 = vxpose.xlu0.b32.cont [4/16] 0.0, 128
        %1261 = vxpose.xlu0.b32.cont [5/16] 0.0, 128
        %1262 = vxpose.xlu0.b32.cont [6/16] 0.0, 128
        %1263 = vxpose.xlu0.b32.cont [7/16] 0.0, 128
        %1264 = vxpose.xlu0.b32.cont [8/16] 0.0, 128
        %1265 = vxpose.xlu0.b32.cont [9/16] 0.0, 128
        %1266 = vxpose.xlu0.b32.cont [10/16] 0.0, 128
        %1267 = vxpose.xlu0.b32.cont [11/16] 0.0, 128
        %1268 = vxpose.xlu0.b32.cont [12/16] 0.0, 128
        %1269 = vxpose.xlu0.b32.cont [13/16] 0.0, 128
        %1270 = vxpose.xlu0.b32.cont [14/16] 0.0, 128
        %1271 = vxpose.xlu0.b32.cont [15/16] 0.0, 128
        %1272 = vxpose.xlu0.b32.end [16/16] 0.0, 128
        %v1273 = vpop.trf.xlu0
        %v1274 = vpop.trf.xlu0
        %v1275 = vpop.trf.xlu0
        %v1276 = vpop.trf.xlu0
        %v1277 = vpop.trf.xlu0
        %v1278 = vpop.trf.xlu0
        %v1279 = vpop.trf.xlu0
        %v1280 = vpop.trf.xlu0
        %v1281 = vpop.trf.xlu0
        %v1282 = vpop.trf.xlu0
        %v1283 = vpop.trf.xlu0
        %v1284 = vpop.trf.xlu0
        %v1285 = vpop.trf.xlu0
        %v1286 = vpop.trf.xlu0
        %v1287 = vpop.trf.xlu0
        %v1288 = vpop.trf.xlu0
        %1289 = vxpose.xlu0.b32.start [1/16] %v876, 128
        %1290 = vxpose.xlu0.b32.cont [2/16] 0.0, 128
        %1291 = vxpose.xlu0.b32.cont [3/16] 0.0, 128
        %1292 = vxpose.xlu0.b32.cont [4/16] 0.0, 128
        %1293 = vxpose.xlu0.b32.cont [5/16] 0.0, 128
        %1294 = vxpose.xlu0.b32.cont [6/16] 0.0, 128
        %1295 = vxpose.xlu0.b32.cont [7/16] 0.0, 128
        %1296 = vxpose.xlu0.b32.cont [8/16] 0.0, 128
        %1297 = vxpose.xlu0.b32.cont [9/16] 0.0, 128
        %1298 = vxpose.xlu0.b32.cont [10/16] 0.0, 128
        %1299 = vxpose.xlu0.b32.cont [11/16] 0.0, 128
        %1300 = vxpose.xlu0.b32.cont [12/16] 0.0, 128
        %1301 = vxpose.xlu0.b32.cont [13/16] 0.0, 128
        %1302 = vxpose.xlu0.b32.cont [14/16] 0.0, 128
        %1303 = vxpose.xlu0.b32.cont [15/16] 0.0, 128
        %1304 = vxpose.xlu0.b32.end [16/16] 0.0, 128
        %v1305 = vpop.trf.xlu0
        %v1306 = vpop.trf.xlu0
        %v1307 = vpop.trf.xlu0
        %v1308 = vpop.trf.xlu0
        %v1309 = vpop.trf.xlu0
        %v1310 = vpop.trf.xlu0
        %v1311 = vpop.trf.xlu0
        %v1312 = vpop.trf.xlu0
        %v1313 = vpop.trf.xlu0
        %v1314 = vpop.trf.xlu0
        %v1315 = vpop.trf.xlu0
        %v1316 = vpop.trf.xlu0
        %v1317 = vpop.trf.xlu0
        %v1318 = vpop.trf.xlu0
        %v1319 = vpop.trf.xlu0
        %v1320 = vpop.trf.xlu0
        %1321 = vxpose.xlu0.b32.start [1/16] %v895, 128
        %1322 = vxpose.xlu0.b32.cont [2/16] 0.0, 128
        %1323 = vxpose.xlu0.b32.cont [3/16] 0.0, 128
        %1324 = vxpose.xlu0.b32.cont [4/16] 0.0, 128
        %1325 = vxpose.xlu0.b32.cont [5/16] 0.0, 128
        %1326 = vxpose.xlu0.b32.cont [6/16] 0.0, 128
        %1327 = vxpose.xlu0.b32.cont [7/16] 0.0, 128
        %1328 = vxpose.xlu0.b32.cont [8/16] 0.0, 128
        %1329 = vxpose.xlu0.b32.cont [9/16] 0.0, 128
        %1330 = vxpose.xlu0.b32.cont [10/16] 0.0, 128
        %1331 = vxpose.xlu0.b32.cont [11/16] 0.0, 128
        %1332 = vxpose.xlu0.b32.cont [12/16] 0.0, 128
        %1333 = vxpose.xlu0.b32.cont [13/16] 0.0, 128
        %1334 = vxpose.xlu0.b32.cont [14/16] 0.0, 128
        %1335 = vxpose.xlu0.b32.cont [15/16] 0.0, 128
        %1336 = vxpose.xlu0.b32.end [16/16] 0.0, 128
        %v1337 = vpop.trf.xlu0
        %v1338 = vpop.trf.xlu0
        %v1339 = vpop.trf.xlu0
        %v1340 = vpop.trf.xlu0
        %v1341 = vpop.trf.xlu0
        %v1342 = vpop.trf.xlu0
        %v1343 = vpop.trf.xlu0
        %v1344 = vpop.trf.xlu0
        %v1345 = vpop.trf.xlu0
        %v1346 = vpop.trf.xlu0
        %v1347 = vpop.trf.xlu0
        %v1348 = vpop.trf.xlu0
        %v1349 = vpop.trf.xlu0
        %v1350 = vpop.trf.xlu0
        %v1351 = vpop.trf.xlu0
        %v1352 = vpop.trf.xlu0
        %1353 = vxpose.xlu0.b32.start [1/16] %v879, 128
        %1354 = vxpose.xlu0.b32.cont [2/16] 0.0, 128
        %1355 = vxpose.xlu0.b32.cont [3/16] 0.0, 128
        %1356 = vxpose.xlu0.b32.cont [4/16] 0.0, 128
        %1357 = vxpose.xlu0.b32.cont [5/16] 0.0, 128
        %1358 = vxpose.xlu0.b32.cont [6/16] 0.0, 128
        %1359 = vxpose.xlu0.b32.cont [7/16] 0.0, 128
        %1360 = vxpose.xlu0.b32.cont [8/16] 0.0, 128
        %1361 = vxpose.xlu0.b32.cont [9/16] 0.0, 128
        %1362 = vxpose.xlu0.b32.cont [10/16] 0.0, 128
        %1363 = vxpose.xlu0.b32.cont [11/16] 0.0, 128
        %1364 = vxpose.xlu0.b32.cont [12/16] 0.0, 128
        %1365 = vxpose.xlu0.b32.cont [13/16] 0.0, 128
        %1366 = vxpose.xlu0.b32.cont [14/16] 0.0, 128
        %1367 = vxpose.xlu0.b32.cont [15/16] 0.0, 128
        %1368 = vxpose.xlu0.b32.end [16/16] 0.0, 128
        %v1369 = vpop.trf.xlu0
        %v1370 = vpop.trf.xlu0
        %v1371 = vpop.trf.xlu0
        %v1372 = vpop.trf.xlu0
        %v1373 = vpop.trf.xlu0
        %v1374 = vpop.trf.xlu0
        %v1375 = vpop.trf.xlu0
        %v1376 = vpop.trf.xlu0
        %v1377 = vpop.trf.xlu0
        %v1378 = vpop.trf.xlu0
        %v1379 = vpop.trf.xlu0
        %v1380 = vpop.trf.xlu0
        %v1381 = vpop.trf.xlu0
        %v1382 = vpop.trf.xlu0
        %v1383 = vpop.trf.xlu0
        %v1384 = vpop.trf.xlu0
        %1385 = vxpose.xlu0.b32.start [1/16] %v896, 128
        %1386 = vxpose.xlu0.b32.cont [2/16] 0.0, 128
        %1387 = vxpose.xlu0.b32.cont [3/16] 0.0, 128
        %1388 = vxpose.xlu0.b32.cont [4/16] 0.0, 128
        %1389 = vxpose.xlu0.b32.cont [5/16] 0.0, 128
        %1390 = vxpose.xlu0.b32.cont [6/16] 0.0, 128
        %1391 = vxpose.xlu0.b32.cont [7/16] 0.0, 128
        %1392 = vxpose.xlu0.b32.cont [8/16] 0.0, 128
        %1393 = vxpose.xlu0.b32.cont [9/16] 0.0, 128
        %1394 = vxpose.xlu0.b32.cont [10/16] 0.0, 128
        %1395 = vxpose.xlu0.b32.cont [11/16] 0.0, 128
        %1396 = vxpose.xlu0.b32.cont [12/16] 0.0, 128
        %1397 = vxpose.xlu0.b32.cont [13/16] 0.0, 128
        %1398 = vxpose.xlu0.b32.cont [14/16] 0.0, 128
        %1399 = vxpose.xlu0.b32.cont [15/16] 0.0, 128
        %1400 = vxpose.xlu0.b32.end [16/16] 0.0, 128
        %v1401 = vpop.trf.xlu0
        %v1402 = vpop.trf.xlu0
        %v1403 = vpop.trf.xlu0
        %v1404 = vpop.trf.xlu0
        %v1405 = vpop.trf.xlu0
        %v1406 = vpop.trf.xlu0
        %v1407 = vpop.trf.xlu0
        %v1408 = vpop.trf.xlu0
        %v1409 = vpop.trf.xlu0
        %v1410 = vpop.trf.xlu0
        %v1411 = vpop.trf.xlu0
        %v1412 = vpop.trf.xlu0
        %v1413 = vpop.trf.xlu0
        %v1414 = vpop.trf.xlu0
        %v1415 = vpop.trf.xlu0
        %v1416 = vpop.trf.xlu0
        %v1418 = vsel %vm819, %v921, 0
        %v1421 = vsel %vm819, %v922, 0
        %v1424 = vsel %vm819, %v953, 0
        %v1427 = vsel %vm819, %v954, 0
        %v1430 = vsel %vm819, %v985, 0
        %v1433 = vsel %vm819, %v986, 0
        %v1436 = vsel %vm819, %v1017, 0
        %v1439 = vsel %vm819, %v1018, 0
        %v1442 = vsel %vm819, %v1049, 0
        %v1445 = vsel %vm819, %v1050, 0
        %v1448 = vsel %vm819, %v1081, 0
        %v1451 = vsel %vm819, %v1082, 0
        %v1454 = vsel %vm819, %v1113, 0
        %v1457 = vsel %vm819, %v1114, 0
        %v1460 = vsel %vm819, %v1145, 0
        %v1463 = vsel %vm819, %v1146, 0
        %v1466 = vsel %vm819, %v1177, 0
        %v1469 = vsel %vm819, %v1178, 0
        %v1472 = vsel %vm819, %v1209, 0
        %v1475 = vsel %vm819, %v1210, 0
        %v1478 = vsel %vm819, %v1241, 0
        %v1481 = vsel %vm819, %v1242, 0
        %v1484 = vsel %vm819, %v1273, 0
        %v1487 = vsel %vm819, %v1274, 0
        %v1490 = vsel %vm819, %v1305, 0
        %v1493 = vsel %vm819, %v1306, 0
        %v1496 = vsel %vm819, %v1337, 0
        %v1499 = vsel %vm819, %v1338, 0
        %v1502 = vsel %vm819, %v1369, 0
        %v1505 = vsel %vm819, %v1370, 0
        %v1508 = vsel %vm819, %v1401, 0
        %v1511 = vsel %vm819, %v1402, 0
        %v1514 = vsel %vm836, %v259, 0
        %1516 = vmatpush.msra.mxu0 0.0
        %1517 = vmatpush.msra.mxu0 0.0
        %1518 = vmatpush.msra.mxu0 0.0
        %1519 = vmatpush.msra.mxu0 0.0
        %1520 = vmatpush.msra.mxu0 0.0
        %1521 = vmatpush.msra.mxu0 0.0
        %1522 = vmatpush.msra.mxu0 0.0
        %1523 = vmatpush.msra.mxu0 0.0
        %1524 = vmatpush.msra.mxu0 0.0
        %1525 = vmatpush.msra.mxu0 0.0
        %1526 = vmatpush.msra.mxu0 0.0
        %1527 = vmatpush.msra.mxu0 0.0
        %1528 = vmatpush.msra.mxu0 0.0
        %1529 = vmatpush.msra.mxu0 0.0
        %1530 = vmatpush.msra.mxu0 0.0
        %1531 = vmatpush.msra.mxu0 %v1514
        %1532 = vmatmul.f32.gmra.mxu0 %v1418
        %v1533 = vpop.f32.mrf.mxu0
        %v1534 = vadd.f32 0.0, %v1533
        %1535 = vmatmul.f32.gmra.mxu0 %v1421
        %v1536 = vpop.f32.mrf.mxu0
        %v1537 = vadd.f32 0.0, %v1536
        %1538 = vmatmul.f32.gmra.mxu0 %v1424
        %v1539 = vpop.f32.mrf.mxu0
        %v1540 = vadd.f32 0.0, %v1539
        %1541 = vmatmul.f32.gmra.mxu0 %v1427
        %v1542 = vpop.f32.mrf.mxu0
        %v1543 = vadd.f32 0.0, %v1542
        %1544 = vmatmul.f32.gmra.mxu0 %v1430
        %v1545 = vpop.f32.mrf.mxu0
        %v1546 = vadd.f32 0.0, %v1545
        %1547 = vmatmul.f32.gmra.mxu0 %v1433
        %v1548 = vpop.f32.mrf.mxu0
        %v1549 = vadd.f32 0.0, %v1548
        %1550 = vmatmul.f32.gmra.mxu0 %v1436
        %v1551 = vpop.f32.mrf.mxu0
        %v1552 = vadd.f32 0.0, %v1551
        %1553 = vmatmul.f32.gmra.mxu0 %v1439
        %v1554 = vpop.f32.mrf.mxu0
        %v1555 = vadd.f32 0.0, %v1554
        %1556 = vmatmul.f32.gmra.mxu0 %v1442
        %v1557 = vpop.f32.mrf.mxu0
        %v1558 = vadd.f32 0.0, %v1557
        %1559 = vmatmul.f32.gmra.mxu0 %v1445
        %v1560 = vpop.f32.mrf.mxu0
        %v1561 = vadd.f32 0.0, %v1560
        %1562 = vmatmul.f32.gmra.mxu0 %v1448
        %v1563 = vpop.f32.mrf.mxu0
        %v1564 = vadd.f32 0.0, %v1563
        %1565 = vmatmul.f32.gmra.mxu0 %v1451
        %v1566 = vpop.f32.mrf.mxu0
        %v1567 = vadd.f32 0.0, %v1566
        %1568 = vmatmul.f32.gmra.mxu0 %v1454
        %v1569 = vpop.f32.mrf.mxu0
        %v1570 = vadd.f32 0.0, %v1569
        %1571 = vmatmul.f32.gmra.mxu0 %v1457
        %v1572 = vpop.f32.mrf.mxu0
        %v1573 = vadd.f32 0.0, %v1572
        %1574 = vmatmul.f32.gmra.mxu0 %v1460
        %v1575 = vpop.f32.mrf.mxu0
        %v1576 = vadd.f32 0.0, %v1575
        %1577 = vmatmul.f32.gmra.mxu0 %v1463
        %v1578 = vpop.f32.mrf.mxu0
        %v1579 = vadd.f32 0.0, %v1578
        %1580 = vmatmul.f32.gmra.mxu0 %v1466
        %v1581 = vpop.f32.mrf.mxu0
        %v1582 = vadd.f32 0.0, %v1581
        %1583 = vmatmul.f32.gmra.mxu0 %v1469
        %v1584 = vpop.f32.mrf.mxu0
        %v1585 = vadd.f32 0.0, %v1584
        %1586 = vmatmul.f32.gmra.mxu0 %v1472
        %v1587 = vpop.f32.mrf.mxu0
        %v1588 = vadd.f32 0.0, %v1587
        %1589 = vmatmul.f32.gmra.mxu0 %v1475
        %v1590 = vpop.f32.mrf.mxu0
        %v1591 = vadd.f32 0.0, %v1590
        %1592 = vmatmul.f32.gmra.mxu0 %v1478
        %v1593 = vpop.f32.mrf.mxu0
        %v1594 = vadd.f32 0.0, %v1593
        %1595 = vmatmul.f32.gmra.mxu0 %v1481
        %v1596 = vpop.f32.mrf.mxu0
        %v1597 = vadd.f32 0.0, %v1596
        %1598 = vmatmul.f32.gmra.mxu0 %v1484
        %v1599 = vpop.f32.mrf.mxu0
        %v1600 = vadd.f32 0.0, %v1599
        %1601 = vmatmul.f32.gmra.mxu0 %v1487
        %v1602 = vpop.f32.mrf.mxu0
        %v1603 = vadd.f32 0.0, %v1602
        %1604 = vmatmul.f32.gmra.mxu0 %v1490
        %v1605 = vpop.f32.mrf.mxu0
        %v1606 = vadd.f32 0.0, %v1605
        %1607 = vmatmul.f32.gmra.mxu0 %v1493
        %v1608 = vpop.f32.mrf.mxu0
        %v1609 = vadd.f32 0.0, %v1608
        %1610 = vmatmul.f32.gmra.mxu0 %v1496
        %v1611 = vpop.f32.mrf.mxu0
        %v1612 = vadd.f32 0.0, %v1611
        %1613 = vmatmul.f32.gmra.mxu0 %v1499
        %v1614 = vpop.f32.mrf.mxu0
        %v1615 = vadd.f32 0.0, %v1614
        %1616 = vmatmul.f32.gmra.mxu0 %v1502
        %v1617 = vpop.f32.mrf.mxu0
        %v1618 = vadd.f32 0.0, %v1617
        %1619 = vmatmul.f32.gmra.mxu0 %v1505
        %v1620 = vpop.f32.mrf.mxu0
        %v1621 = vadd.f32 0.0, %v1620
        %1622 = vmatmul.f32.gmra.mxu0 %v1508
        %v1623 = vpop.f32.mrf.mxu0
        %v1624 = vadd.f32 0.0, %v1623
        %1625 = vmatmul.f32.gmra.mxu0 %v1511
        %v1626 = vpop.f32.mrf.mxu0
        %v1627 = vadd.f32 0.0, %v1626
        %1628 = vdwg.mxu0
        %vm1629 = vcmask 130048
        %1630 = vst.msk [vmem:[%s223] sm:$0xff] %vm1629, %v1534
        %1631 = vst.msk [vmem:[%s223 + $0x8] sm:$0xff] %vm1629, %v1537
        %1632 = vst.msk [vmem:[%s223 + $0x10] sm:$0xff] %vm1629, %v1540
        %1633 = vst.msk [vmem:[%s223 + $0x18] sm:$0xff] %vm1629, %v1543
        %1634 = vst.msk [vmem:[%s223 + $0x20] sm:$0xff] %vm1629, %v1546
        %1635 = vst.msk [vmem:[%s223 + $0x28] sm:$0xff] %vm1629, %v1549
        %1636 = vst.msk [vmem:[%s223 + $0x30] sm:$0xff] %vm1629, %v1552
        %1637 = vst.msk [vmem:[%s223 + $0x38] sm:$0xff] %vm1629, %v1555
        %1638 = vst.msk [vmem:[%s223 + $0x40] sm:$0xff] %vm1629, %v1558
        %1639 = vst.msk [vmem:[%s223 + $0x48] sm:$0xff] %vm1629, %v1561
        %1640 = vst.msk [vmem:[%s223 + $0x50] sm:$0xff] %vm1629, %v1564
        %1641 = vst.msk [vmem:[%s223 + $0x58] sm:$0xff] %vm1629, %v1567
        %1642 = vst.msk [vmem:[%s223 + $0x60] sm:$0xff] %vm1629, %v1570
        %1643 = vst.msk [vmem:[%s223 + $0x68] sm:$0xff] %vm1629, %v1573
        %1644 = vst.msk [vmem:[%s223 + $0x70] sm:$0xff] %vm1629, %v1576
        %1645 = vst.msk [vmem:[%s223 + $0x78] sm:$0xff] %vm1629, %v1579
        %1646 = vst.msk [vmem:[%s230] sm:$0xff] %vm1629, %v1582
        %1647 = vst.msk [vmem:[%s230 + $0x8] sm:$0xff] %vm1629, %v1585
        %1648 = vst.msk [vmem:[%s230 + $0x10] sm:$0xff] %vm1629, %v1588
        %1649 = vst.msk [vmem:[%s230 + $0x18] sm:$0xff] %vm1629, %v1591
        %1650 = vst.msk [vmem:[%s230 + $0x20] sm:$0xff] %vm1629, %v1594
        %1651 = vst.msk [vmem:[%s230 + $0x28] sm:$0xff] %vm1629, %v1597
        %1652 = vst.msk [vmem:[%s230 + $0x30] sm:$0xff] %vm1629, %v1600
        %1653 = vst.msk [vmem:[%s230 + $0x38] sm:$0xff] %vm1629, %v1603
        %1654 = vst.msk [vmem:[%s230 + $0x40] sm:$0xff] %vm1629, %v1606
        %1655 = vst.msk [vmem:[%s230 + $0x48] sm:$0xff] %vm1629, %v1609
        %1656 = vst.msk [vmem:[%s230 + $0x50] sm:$0xff] %vm1629, %v1612
        %1657 = vst.msk [vmem:[%s230 + $0x58] sm:$0xff] %vm1629, %v1615
        %1658 = vst.msk [vmem:[%s230 + $0x60] sm:$0xff] %vm1629, %v1618
        %1659 = vst.msk [vmem:[%s230 + $0x68] sm:$0xff] %vm1629, %v1621
        %1660 = vst.msk [vmem:[%s230 + $0x70] sm:$0xff] %vm1629, %v1624
        %1661 = vst.msk [vmem:[%s230 + $0x78] sm:$0xff] %vm1629, %v1627
        %s1662 = sand.u32 %s117, 1
        %s1663 = scalar_lea.sflag [#allocation3], %s1662
        %s1664 = sand.u32 %s117, 1
        %s1665 = smul.addr %s1664, 128
        %s1666 = scalar_lea.vmem [#allocation2], %s1665
        %s1667 = sand.u32 %s145, 1
        %s1668 = scalar_lea.sflag [#allocation5], %s1667
        %s1669 = sand.u32 %s145, 1
        %s1670 = smul.addr %s1669, 128
        %s1671 = scalar_lea.vmem [#allocation4], %s1670
        // Predicated region
        $region33: #{_forward_impl.3} parent=31 // pred_check
          %p1672 = pneg %p127
        $region34: #{_forward_impl.3} parent=31 // pred_check_branch
          %1674 = sbr.rel (%p1672) target = $region36
        $region35: #{_forward_impl.3} parent=31 // pred_region
          %s1675 = smul.u32 2, %s27
          %1677 = vsyncadd %s1663, 0
          %s1678 = smul.addr %s26, 16
          %s1679 = sadd.s32 %s1675, %s1678
          %s1680 = smul.addr %s1679, 8
          %s1681 = scalar_lea.hbm %s3, %s1680
          %s1682 = sshll.u32 %s1666, 4
          %s1683 = int_to_ptr.vmem [resolvable:$true] %s1682
          %s1684 = sshll.u32 %s1681, 4
          %s1685 = int_to_ptr.hbm [resolvable:$true] %s1684
          %1690 = dma.vmem_to_hbm [thread:$0]  %s1683, 2048, %s1685, %s1663, 128, 128, 8
        $region36: #{_forward_impl.3} parent=31 // pred_fallthru
          _
        // Predicated region
        $region37: #{_forward_impl.3} parent=31 // pred_check
          %p1691 = pneg %p155
        $region38: #{_forward_impl.3} parent=31 // pred_check_branch
          %1693 = sbr.rel (%p1691) target = $region40
        $region39: #{_forward_impl.3} parent=31 // pred_region
          %s1694 = smul.u32 2, %s27
          %1696 = vsyncadd %s1668, 0
          %s1697 = smul.addr %s26, 16
          %s1698 = sadd.s32 %s1694, %s1697
          %s1699 = smul.addr %s1698, 8
          %s1700 = scalar_lea.hbm %s4, %s1699
          %s1701 = sshll.u32 %s1671, 4
          %s1702 = int_to_ptr.vmem [resolvable:$true] %s1701
          %s1703 = sshll.u32 %s1700, 4
          %s1704 = int_to_ptr.hbm [resolvable:$true] %s1703
          %1709 = dma.vmem_to_hbm [thread:$0]  %s1702, 2048, %s1704, %s1668, 128, 128, 8
        $region40: #{_forward_impl.3} parent=31 // pred_fallthru
          _
      $region32: #{_forward_impl.3} parent=5 // pred_fallthru
        _
      %p1710 = scmp.le.s32.totalorder 2, %s17
      // Predicated region
      $region41: #{_forward_impl.3} parent=5 // pred_check
        %p1711 = pneg %p1710
      $region42: #{_forward_impl.3} parent=5 // pred_check_branch
        %1713 = sbr.rel (%p1711) target = $region44
      $region43: #{_forward_impl.3} parent=5 // pred_region
        %s1714 = ssub.s32 %s17, 2
        // Predicated region
        $region45: #{_forward_impl.3} parent=43 // pred_check
          %p1715 = pneg %p133
        $region46: #{_forward_impl.3} parent=43 // pred_check_branch
          %1717 = sbr.rel (%p1715) target = $region48
        $region47: #{_forward_impl.3} parent=43 // pred_region
          %s1718 = sand.u32 %s118, 1
          %s1719 = scalar_lea.sflag [#allocation3], %s1718
          %s1720 = sand.u32 %s118, 1
          %s1721 = smul.addr %s1720, 128
          %s1722 = scalar_lea.vmem [#allocation2], %s1721
          %1724 = dma.done %s1719, 2048
        $region48: #{_forward_impl.3} parent=43 // pred_fallthru
          _
        // Predicated region
        $region49: #{_forward_impl.3} parent=43 // pred_check
          %p1725 = pneg %p161
        $region50: #{_forward_impl.3} parent=43 // pred_check_branch
          %1727 = sbr.rel (%p1725) target = $region52
        $region51: #{_forward_impl.3} parent=43 // pred_region
          %s1728 = sand.u32 %s146, 1
          %s1729 = scalar_lea.sflag [#allocation5], %s1728
          %s1730 = sand.u32 %s146, 1
          %s1731 = smul.addr %s1730, 128
          %s1732 = scalar_lea.vmem [#allocation4], %s1731
          %1734 = dma.done %s1729, 2048
        $region52: #{_forward_impl.3} parent=43 // pred_fallthru
          _
      $region44: #{_forward_impl.3} parent=5 // pred_fallthru
        _
    $region6: #{_forward_impl.3} parent=1 // loop_footer
      %s21 = sadd.s32 1, %s17
    $region7: #{_forward_impl.3} parent=1 // loop_footer_branch
      %16 = sbr.rel target = $region3
    $region8: #{_forward_impl.3} parent=1 // loop_exit
      _
    %1735 = vsyncpa [#allocation3], 1
    %s1736 = scalar_lea.sflag [#allocation3], 1
    %1737 = vsyncpa %s1736, 1
    %1738 = vsyncpa [#allocation5], 1
    %s1739 = scalar_lea.sflag [#allocation5], 1
    %1740 = vsyncpa %s1739, 1

</llo_original>
